<compile_context>
chip_gen: v5e
topology: v5e:2x2
jax: 0.10.0
libtpu: 0.0.40
codegen_flags: <defaults>
</compile_context>

<pallas_src>
import numpy as np
import jax
import jax.numpy as jnp
from jax.experimental import pallas as pl
from jax.experimental.pallas import tpu as pltpu

BN_EPS = 1e-5


# --------------------------------------------------------------------------
# Fused Pallas kernel (whole TG forward for ONE graph per grid step)
# --------------------------------------------------------------------------
def make_tg_kernel(layer_meta, final_node):
    """layer_meta: list of (n_clusters, pad) static ints per GNN layer.

    Ref order:
      x (N, F)                                   [per-graph tile]
      per layer: a_cat (2*pad, N_l), w (Fin, D), b (1, D)   [resident]
      w1e (final_node*D, 1024) bf16, b1e (1, 1024) f32,
      w2e (1024, 256) bf16,      b2e (1, 256) f32           [resident]
      out (1, 256)
    """
    layer_cell = len(layer_meta)

    def kernel(*refs):
        idx = 0
        x_ref = refs[idx]; idx += 1
        layer_refs = [refs[idx + 3 * l: idx + 3 * l + 3] for l in range(layer_cell)]
        idx += 3 * layer_cell
        w1e_ref, b1e_ref, w2e_ref, b2e_ref = refs[idx:idx + 4]; idx += 4
        o_ref = refs[idx]

        h = x_ref[...]                                          # (N, F), this graph

        # --- GNN layers: conv -> ReLU -> pairwise-cluster max-pool ---
        # a_cat stacks the even rows (rows [0:C)) and odd rows (rows [pad:pad+C))
        # of the row-normalized self-loop adjacency -> ONE matmul per layer,
        # sublane-aligned split, one 3-way max (bias shared by both branches):
        #   pooled = max(max(A_even@hW, A_odd@hW) + b, 0)
        # BN(affine=False, eval) scale is folded into the next weight (host).
        for (ac_ref, w_ref, b_ref), (C, pad) in zip(layer_refs, layer_meta):
            fin = h.shape[1]
            d = w_ref.shape[1]
            if fin < d:   # layer 1: F=3 < D=8 -> contract the narrow dim first
                hc = jnp.dot(jnp.dot(ac_ref[...], h,
                                     preferred_element_type=jnp.float32),
                             w_ref[...], preferred_element_type=jnp.float32)
            else:
                hc = jnp.dot(ac_ref[...],
                             jnp.dot(h, w_ref[...],
                                     preferred_element_type=jnp.float32),
                             preferred_element_type=jnp.float32)
            he = hc[0:C, :]
            ho = hc[pad:pad + C, :]
            h = jnp.maximum(jnp.maximum(he, ho) + b_ref[...], 0.0)

        # --- cell_emb MLP ---
        # torch flatten (1, final_node*D) folded into the first Linear via
        # static ref slices of w1e (no sel matrices, no in-kernel reshape).
        d = h.shape[1]
        z1 = b1e_ref[...]                                       # (1, 1024) f32
        for c in range(final_node):
            z1 = z1 + jnp.dot(h[c:c + 1, :].astype(jnp.bfloat16),
                              w1e_ref[c * d:(c + 1) * d, :],
                              preferred_element_type=jnp.float32)
        z1 = jnp.maximum(z1, 0.0)                               # ReLU (Dropout=id)
        z2 = jnp.dot(z1.astype(jnp.bfloat16), w2e_ref[...],
                     preferred_element_type=jnp.float32) + b2e_ref[...]
        o_ref[...] = jnp.maximum(z2, 0.0)                       # ReLU (Dropout=id)

    return kernel


# --------------------------------------------------------------------------
# Static graph / cluster hierarchy (cluster_predefine equivalent)
# --------------------------------------------------------------------------
def build_graph_hierarchy(n_nodes, layer_cell):
    """Ring graph + predefined pairwise clusters per layer.

    Returns per-layer (A_cat, n_clusters, pad) where A_cat (2*pad, N_l) holds
    the even rows of the row-normalized self-loop adjacency in rows [0:C) and
    the odd rows in rows [pad:pad+C) (pad = C rounded up to 8 sublanes), plus
    the final node count (= GNN_cell.final_node)."""
    A = np.zeros((n_nodes, n_nodes), np.float32)
    for i in range(n_nodes):
        A[i, (i + 1) % n_nodes] = 1.0
        A[i, (i - 1) % n_nodes] = 1.0

    layers = []
    cur_A, cur_n = A, n_nodes
    for _ in range(layer_cell):
        assert cur_n % 2 == 0, "pairwise predefined clusters need an even node count"
        cluster = np.arange(cur_n) // 2                 # predefined clusters
        n_clusters = cur_n // 2
        pad = ((n_clusters + 7) // 8) * 8               # sublane-aligned split point

        A_hat = cur_A + np.eye(cur_n, dtype=np.float32)
        A_norm = A_hat / A_hat.sum(axis=1, keepdims=True)
        a_cat = np.zeros((2 * pad, cur_n), np.float32)
        a_cat[0:n_clusters] = A_norm[0::2]
        a_cat[pad:pad + n_clusters] = A_norm[1::2]
        layers.append((a_cat, n_clusters, pad))

        # coarsen adjacency for the next layer (pool_edge semantics)
        mask = np.zeros((n_clusters, cur_n), np.float32)
        mask[cluster, np.arange(cur_n)] = 1.0
        cur_A = (mask @ cur_A @ mask.T > 0).astype(np.float32)
        np.fill_diagonal(cur_A, 0.0)
        cur_n = n_clusters
    return layers, cur_n


# --------------------------------------------------------------------------
# TG forward (single fused pallas_call, grid over batch)
# --------------------------------------------------------------------------
def tg_forward(x, gnn_params, emb_params, adj_cats, layer_meta):
    B, N, F = x.shape
    final_node = layer_meta[-1][0]

    # BatchNorm1d(dim_cell, affine=False) in eval mode with fresh running
    # stats: y = x / sqrt(1 + eps).  Fold the scale of layer l into the
    # weight that consumes its output (exact in eval mode).
    inv = float(1.0 / np.sqrt(1.0 + BN_EPS))
    ws = [w for (w, _) in gnn_params]
    bs = [b for (_, b) in gnn_params]
    ws = [ws[0]] + [w * inv for w in ws[1:]]
    w1e, b1e, w2e, b2e = emb_params
    # bf16 for the dominant weight traffic; f32 accumulation in the kernel.
    w1e = (w1e * inv).astype(jnp.bfloat16)
    w2e = w2e.astype(jnp.bfloat16)

    args = [x]
    for ac, w, b in zip(adj_cats, ws, bs):
        args += [ac, w, b]
    args += [w1e, b1e, w2e, b2e]
    out_dim = w2e.shape[1]

    # x is tiled per graph; everything else uses a constant index_map so it is
    # DMA'd once and stays VMEM-resident across the batch grid.
    in_specs = [pl.BlockSpec((pl.Squeezed(), N, F), lambda b: (b, 0, 0))]
    for a in args[1:]:
        in_specs.append(pl.BlockSpec(a.shape, lambda b: (0, 0)))
    out_specs = pl.BlockSpec((pl.Squeezed(), 1, out_dim), lambda b: (b, 0, 0))

    # Advisory cost estimate so XLA can schedule/overlap this small call.
    flops_g = 0
    rows, cols = N, F
    for ac, w, (C, pad) in zip(adj_cats, ws, layer_meta):
        d = w.shape[1]
        r2, c2 = ac.shape
        if cols < d:
            flops_g += 2 * r2 * c2 * cols + 2 * r2 * cols * d
        else:
            flops_g += 2 * rows * cols * d + 2 * r2 * c2 * d
        rows, cols = C, d
    flops_g += 2 * final_node * cols * w1e.shape[1] + 2 * w1e.shape[1] * out_dim
    bytes_accessed = sum(int(np.prod(a.shape)) * jnp.dtype(a.dtype).itemsize
                         for a in args) + B * out_dim * 4
    cost = pl.CostEstimate(flops=int(B * flops_g), transcendentals=0,
                           bytes_accessed=int(bytes_accessed))

    kernel = make_tg_kernel(layer_meta, final_node)
    out = pl.pallas_call(
        kernel,
        out_shape=jax.ShapeDtypeStruct((B, 1, out_dim), jnp.float32),
        grid=(B,),
        in_specs=in_specs,
        out_specs=out_specs,
        compiler_params=pltpu.CompilerParams(dimension_semantics=("parallel",)),
        cost_estimate=cost,
    )(*args)
    return out.reshape(B, out_dim)


if __name__ == "__main__":
    # shapes consistent with the module:
    #   num_feature = 3, layer_cell = args.layer = 3, dim_cell = args.hidden_dim = 8
    B, N, F = 2, 16, 3
    layer_cell, dim_cell = 3, 8

    layers_np, final_node = build_graph_hierarchy(N, layer_cell)
    adj_cats = [jnp.asarray(a) for (a, _, _) in layers_np]
    layer_meta = [(C, pad) for (_, C, pad) in layers_np]

    key = jax.random.PRNGKey(0)
    keys = jax.random.split(key, 2 * layer_cell + 5)

    # deterministic GNN layer params
    gnn_params = []
    fin = F
    for l in range(layer_cell):
        w = 0.1 * jax.random.normal(keys[2 * l], (fin, dim_cell), jnp.float32)
        b = 0.01 * jax.random.normal(keys[2 * l + 1], (1, dim_cell), jnp.float32)
        gnn_params.append((w, b))
        fin = dim_cell

    # deterministic cell_emb params: Linear(dim_cell*final_node, 1024), Linear(1024, 256)
    d_in = dim_cell * final_node
    w1 = 0.05 * jax.random.normal(keys[-5], (d_in, 1024), jnp.float32)
    b1 = 0.01 * jax.random.normal(keys[-4], (1, 1024), jnp.float32)
    w2 = 0.05 * jax.random.normal(keys[-3], (1024, 256), jnp.float32)
    b2 = 0.01 * jax.random.normal(keys[-2], (1, 256), jnp.float32)
    emb_params = (w1, b1, w2, b2)

    # input: batched cell-graph node features, layout (B, N, F)
    x = jax.random.normal(keys[-1], (B, N, F), jnp.float32)

    out = tg_forward(x, gnn_params, emb_params, adj_cats, layer_meta)
    out = jax.block_until_ready(out)
    assert out.shape == (B, 256), out.shape
    assert bool(jnp.all(jnp.isfinite(out)))
    print("KERNEL_OK")
</pallas_src>

<mosaic_0001>
module attributes {stable_mosaic.version = 11 : i64} {
  func.func @kernel(%arg0: i32, %arg1: memref<1x16x3xf32, #tpu.memory_space<vmem>>, %arg2: memref<16x16xf32, #tpu.memory_space<vmem>>, %arg3: memref<3x8xf32, #tpu.memory_space<vmem>>, %arg4: memref<1x8xf32, #tpu.memory_space<vmem>>, %arg5: memref<16x8xf32, #tpu.memory_space<vmem>>, %arg6: memref<8x8xf32, #tpu.memory_space<vmem>>, %arg7: memref<1x8xf32, #tpu.memory_space<vmem>>, %arg8: memref<16x4xf32, #tpu.memory_space<vmem>>, %arg9: memref<8x8xf32, #tpu.memory_space<vmem>>, %arg10: memref<1x8xf32, #tpu.memory_space<vmem>>, %arg11: memref<16x1024xbf16, #tpu.memory_space<vmem>>, %arg12: memref<1x1024xf32, #tpu.memory_space<vmem>>, %arg13: memref<1024x256xbf16, #tpu.memory_space<vmem>>, %arg14: memref<1x256xf32, #tpu.memory_space<vmem>>, %arg15: memref<1x1x256xf32, #tpu.memory_space<vmem>>) attributes {dimension_semantics = [#tpu.dimension_semantics<parallel>], iteration_bounds = array<i64: 2>, scalar_prefetch = 0 : i64, scratch_operands = 0 : i64, tpu.core_type = #tpu.core_type<tc>, window_params = [{transform_indices = @transform_0, window_bounds = array<i64: 1, 16, 3>}, {pipeline_mode = #tpu.pipeline_mode<synchronous>, transform_indices = @transform_1, window_bounds = array<i64: 16, 16>}, {pipeline_mode = #tpu.pipeline_mode<synchronous>, transform_indices = @transform_2, window_bounds = array<i64: 3, 8>}, {pipeline_mode = #tpu.pipeline_mode<synchronous>, transform_indices = @transform_3, window_bounds = array<i64: 1, 8>}, {pipeline_mode = #tpu.pipeline_mode<synchronous>, transform_indices = @transform_4, window_bounds = array<i64: 16, 8>}, {pipeline_mode = #tpu.pipeline_mode<synchronous>, transform_indices = @transform_5, window_bounds = array<i64: 8, 8>}, {pipeline_mode = #tpu.pipeline_mode<synchronous>, transform_indices = @transform_6, window_bounds = array<i64: 1, 8>}, {pipeline_mode = #tpu.pipeline_mode<synchronous>, transform_indices = @transform_7, window_bounds = array<i64: 16, 4>}, {pipeline_mode = #tpu.pipeline_mode<synchronous>, transform_indices = @transform_8, window_bounds = array<i64: 8, 8>}, {pipeline_mode = #tpu.pipeline_mode<synchronous>, transform_indices = @transform_9, window_bounds = array<i64: 1, 8>}, {pipeline_mode = #tpu.pipeline_mode<synchronous>, transform_indices = @transform_10, window_bounds = array<i64: 16, 1024>}, {pipeline_mode = #tpu.pipeline_mode<synchronous>, transform_indices = @transform_11, window_bounds = array<i64: 1, 1024>}, {pipeline_mode = #tpu.pipeline_mode<synchronous>, transform_indices = @transform_12, window_bounds = array<i64: 1024, 256>}, {pipeline_mode = #tpu.pipeline_mode<synchronous>, transform_indices = @transform_13, window_bounds = array<i64: 1, 256>}, {transform_indices = @transform_14, window_bounds = array<i64: 1, 1, 256>}]} {
    %c0 = arith.constant 0 : index
    %c0_0 = arith.constant 0 : index
    %c0_1 = arith.constant 0 : index
    %0 = vector.load %arg1[%c0, %c0_0, %c0_1] : memref<1x16x3xf32, #tpu.memory_space<vmem>>, vector<1x16x3xf32>
    %1 = vector.shape_cast %0 : vector<1x16x3xf32> to vector<16x3xf32>
    %c0_2 = arith.constant 0 : index
    %c0_3 = arith.constant 0 : index
    %2 = vector.load %arg2[%c0_2, %c0_3] : memref<16x16xf32, #tpu.memory_space<vmem>>, vector<16x16xf32>
    %cst = arith.constant dense<0.000000e+00> : vector<16x3xf32>
    %3 = tpu.matmul %2, %1, %cst {dimension_numbers = #tpu.dot_dimension_numbers<[1], [0], [0], [1], [0, 0, 1, 1], [], []>} : vector<16x16xf32>, vector<16x3xf32>, vector<16x3xf32> -> vector<16x3xf32>
    %c0_4 = arith.constant 0 : index
    %c0_5 = arith.constant 0 : index
    %4 = vector.load %arg3[%c0_4, %c0_5] : memref<3x8xf32, #tpu.memory_space<vmem>>, vector<3x8xf32>
    %cst_6 = arith.constant dense<0.000000e+00> : vector<16x8xf32>
    %5 = tpu.matmul %3, %4, %cst_6 {dimension_numbers = #tpu.dot_dimension_numbers<[1], [0], [0], [1], [0, 0, 1, 1], [], []>} : vector<16x3xf32>, vector<3x8xf32>, vector<16x8xf32> -> vector<16x8xf32>
    %6 = vector.extract_strided_slice %5 {offsets = [0, 0], sizes = [8, 8], strides = [1, 1]} : vector<16x8xf32> to vector<8x8xf32>
    %7 = vector.extract_strided_slice %5 {offsets = [8, 0], sizes = [8, 8], strides = [1, 1]} : vector<16x8xf32> to vector<8x8xf32>
    %8 = arith.maximumf %6, %7 : vector<8x8xf32>
    %c0_7 = arith.constant 0 : index
    %c0_8 = arith.constant 0 : index
    %9 = vector.load %arg4[%c0_7, %c0_8] : memref<1x8xf32, #tpu.memory_space<vmem>>, vector<1x8xf32>
    %10 = vector.broadcast %9 : vector<1x8xf32> to vector<8x8xf32>
    %11 = arith.addf %8, %10 : vector<8x8xf32>
    %cst_9 = arith.constant 0.000000e+00 : f32
    %12 = vector.broadcast %cst_9 : f32 to vector<8x8xf32>
    %13 = arith.maximumf %11, %12 : vector<8x8xf32>
    %c0_10 = arith.constant 0 : index
    %c0_11 = arith.constant 0 : index
    %14 = vector.load %arg5[%c0_10, %c0_11] : memref<16x8xf32, #tpu.memory_space<vmem>>, vector<16x8xf32>
    %c0_12 = arith.constant 0 : index
    %c0_13 = arith.constant 0 : index
    %15 = vector.load %arg6[%c0_12, %c0_13] : memref<8x8xf32, #tpu.memory_space<vmem>>, vector<8x8xf32>
    %cst_14 = arith.constant dense<0.000000e+00> : vector<8x8xf32>
    %16 = tpu.matmul %13, %15, %cst_14 {dimension_numbers = #tpu.dot_dimension_numbers<[1], [0], [0], [1], [0, 0, 1, 1], [], []>} : vector<8x8xf32>, vector<8x8xf32>, vector<8x8xf32> -> vector<8x8xf32>
    %cst_15 = arith.constant dense<0.000000e+00> : vector<16x8xf32>
    %17 = tpu.matmul %14, %16, %cst_15 {dimension_numbers = #tpu.dot_dimension_numbers<[1], [0], [0], [1], [0, 0, 1, 1], [], []>} : vector<16x8xf32>, vector<8x8xf32>, vector<16x8xf32> -> vector<16x8xf32>
    %18 = vector.extract_strided_slice %17 {offsets = [0, 0], sizes = [4, 8], strides = [1, 1]} : vector<16x8xf32> to vector<4x8xf32>
    %19 = vector.extract_strided_slice %17 {offsets = [8, 0], sizes = [4, 8], strides = [1, 1]} : vector<16x8xf32> to vector<4x8xf32>
    %20 = arith.maximumf %18, %19 : vector<4x8xf32>
    %c0_16 = arith.constant 0 : index
    %c0_17 = arith.constant 0 : index
    %21 = vector.load %arg7[%c0_16, %c0_17] : memref<1x8xf32, #tpu.memory_space<vmem>>, vector<1x8xf32>
    %22 = vector.broadcast %21 : vector<1x8xf32> to vector<4x8xf32>
    %23 = arith.addf %20, %22 : vector<4x8xf32>
    %cst_18 = arith.constant 0.000000e+00 : f32
    %24 = vector.broadcast %cst_18 : f32 to vector<4x8xf32>
    %25 = arith.maximumf %23, %24 : vector<4x8xf32>
    %c0_19 = arith.constant 0 : index
    %c0_20 = arith.constant 0 : index
    %26 = vector.load %arg8[%c0_19, %c0_20] : memref<16x4xf32, #tpu.memory_space<vmem>>, vector<16x4xf32>
    %c0_21 = arith.constant 0 : index
    %c0_22 = arith.constant 0 : index
    %27 = vector.load %arg9[%c0_21, %c0_22] : memref<8x8xf32, #tpu.memory_space<vmem>>, vector<8x8xf32>
    %cst_23 = arith.constant dense<0.000000e+00> : vector<4x8xf32>
    %28 = tpu.matmul %25, %27, %cst_23 {dimension_numbers = #tpu.dot_dimension_numbers<[1], [0], [0], [1], [0, 0, 1, 1], [], []>} : vector<4x8xf32>, vector<8x8xf32>, vector<4x8xf32> -> vector<4x8xf32>
    %cst_24 = arith.constant dense<0.000000e+00> : vector<16x8xf32>
    %29 = tpu.matmul %26, %28, %cst_24 {dimension_numbers = #tpu.dot_dimension_numbers<[1], [0], [0], [1], [0, 0, 1, 1], [], []>} : vector<16x4xf32>, vector<4x8xf32>, vector<16x8xf32> -> vector<16x8xf32>
    %30 = vector.extract_strided_slice %29 {offsets = [0, 0], sizes = [2, 8], strides = [1, 1]} : vector<16x8xf32> to vector<2x8xf32>
    %31 = vector.extract_strided_slice %29 {offsets = [8, 0], sizes = [2, 8], strides = [1, 1]} : vector<16x8xf32> to vector<2x8xf32>
    %32 = arith.maximumf %30, %31 : vector<2x8xf32>
    %c0_25 = arith.constant 0 : index
    %c0_26 = arith.constant 0 : index
    %33 = vector.load %arg10[%c0_25, %c0_26] : memref<1x8xf32, #tpu.memory_space<vmem>>, vector<1x8xf32>
    %34 = vector.broadcast %33 : vector<1x8xf32> to vector<2x8xf32>
    %35 = arith.addf %32, %34 : vector<2x8xf32>
    %cst_27 = arith.constant 0.000000e+00 : f32
    %36 = vector.broadcast %cst_27 : f32 to vector<2x8xf32>
    %37 = arith.maximumf %35, %36 : vector<2x8xf32>
    %c0_28 = arith.constant 0 : index
    %c0_29 = arith.constant 0 : index
    %38 = vector.load %arg12[%c0_28, %c0_29] : memref<1x1024xf32, #tpu.memory_space<vmem>>, vector<1x1024xf32>
    %39 = vector.extract_strided_slice %37 {offsets = [0, 0], sizes = [1, 8], strides = [1, 1]} : vector<2x8xf32> to vector<1x8xf32>
    %40 = arith.truncf %39 : vector<1x8xf32> to vector<1x8xbf16>
    %c0_30 = arith.constant 0 : index
    %c0_31 = arith.constant 0 : index
    %41 = vector.load %arg11[%c0_30, %c0_31] : memref<16x1024xbf16, #tpu.memory_space<vmem>>, vector<8x1024xbf16>
    %cst_32 = arith.constant dense<0.000000e+00> : vector<1x1024xf32>
    %42 = tpu.matmul %40, %41, %cst_32 {dimension_numbers = #tpu.dot_dimension_numbers<[1], [0], [0], [1], [0, 0, 1, 1], [], []>} : vector<1x8xbf16>, vector<8x1024xbf16>, vector<1x1024xf32> -> vector<1x1024xf32>
    %43 = arith.addf %38, %42 : vector<1x1024xf32>
    %44 = vector.extract_strided_slice %37 {offsets = [1, 0], sizes = [1, 8], strides = [1, 1]} : vector<2x8xf32> to vector<1x8xf32>
    %45 = arith.truncf %44 : vector<1x8xf32> to vector<1x8xbf16>
    %c8 = arith.constant 8 : index
    %c0_33 = arith.constant 0 : index
    %46 = vector.load %arg11[%c8, %c0_33] : memref<16x1024xbf16, #tpu.memory_space<vmem>>, vector<8x1024xbf16>
    %cst_34 = arith.constant dense<0.000000e+00> : vector<1x1024xf32>
    %47 = tpu.matmul %45, %46, %cst_34 {dimension_numbers = #tpu.dot_dimension_numbers<[1], [0], [0], [1], [0, 0, 1, 1], [], []>} : vector<1x8xbf16>, vector<8x1024xbf16>, vector<1x1024xf32> -> vector<1x1024xf32>
    %48 = arith.addf %43, %47 : vector<1x1024xf32>
    %cst_35 = arith.constant 0.000000e+00 : f32
    %49 = vector.broadcast %cst_35 : f32 to vector<1x1024xf32>
    %50 = arith.maximumf %48, %49 : vector<1x1024xf32>
    %51 = arith.truncf %50 : vector<1x1024xf32> to vector<1x1024xbf16>
    %c0_36 = arith.constant 0 : index
    %c0_37 = arith.constant 0 : index
    %52 = vector.load %arg13[%c0_36, %c0_37] : memref<1024x256xbf16, #tpu.memory_space<vmem>>, vector<1024x256xbf16>
    %cst_38 = arith.constant dense<0.000000e+00> : vector<1x256xf32>
    %53 = tpu.matmul %51, %52, %cst_38 {dimension_numbers = #tpu.dot_dimension_numbers<[1], [0], [0], [1], [0, 0, 1, 1], [], []>} : vector<1x1024xbf16>, vector<1024x256xbf16>, vector<1x256xf32> -> vector<1x256xf32>
    %c0_39 = arith.constant 0 : index
    %c0_40 = arith.constant 0 : index
    %54 = vector.load %arg14[%c0_39, %c0_40] : memref<1x256xf32, #tpu.memory_space<vmem>>, vector<1x256xf32>
    %55 = arith.addf %53, %54 : vector<1x256xf32>
    %cst_41 = arith.constant 0.000000e+00 : f32
    %56 = vector.broadcast %cst_41 : f32 to vector<1x256xf32>
    %57 = arith.maximumf %55, %56 : vector<1x256xf32>
    %c0_42 = arith.constant 0 : index
    %c0_43 = arith.constant 0 : index
    %c0_44 = arith.constant 0 : index
    %58 = vector.load %arg15[%c0_42, %c0_43, %c0_44] : memref<1x1x256xf32, #tpu.memory_space<vmem>>, vector<1x1x256xf32>
    %59 = vector.shape_cast %58 : vector<1x1x256xf32> to vector<1x256xf32>
    %60 = vector.shape_cast %57 : vector<1x256xf32> to vector<1x1x256xf32>
    tpu.vector_store %arg15[%c0_42, %c0_43, %c0_44], %60 {strides = array<i32>} : memref<1x1x256xf32, #tpu.memory_space<vmem>>, vector<1x1x256xf32>,
    return
  }
  func.func @transform_0(%arg0: i32) -> (i32, i32, i32) {
    %c0_i32 = arith.constant 0 : i32
    %c0_i32_0 = arith.constant 0 : i32
    %c0_i32_1 = arith.constant 0 : i32
    return %arg0, %c0_i32, %c0_i32_0 : i32, i32, i32
  }
  func.func @transform_1(%arg0: i32) -> (i32, i32) {
    %c0_i32 = arith.constant 0 : i32
    %c0_i32_0 = arith.constant 0 : i32
    %c0_i32_1 = arith.constant 0 : i32
    return %c0_i32, %c0_i32_0 : i32, i32
  }
  func.func @transform_2(%arg0: i32) -> (i32, i32) {
    %c0_i32 = arith.constant 0 : i32
    %c0_i32_0 = arith.constant 0 : i32
    %c0_i32_1 = arith.constant 0 : i32
    return %c0_i32, %c0_i32_0 : i32, i32
  }
  func.func @transform_3(%arg0: i32) -> (i32, i32) {
    %c0_i32 = arith.constant 0 : i32
    %c0_i32_0 = arith.constant 0 : i32
    %c0_i32_1 = arith.constant 0 : i32
    return %c0_i32, %c0_i32_0 : i32, i32
  }
  func.func @transform_4(%arg0: i32) -> (i32, i32) {
    %c0_i32 = arith.constant 0 : i32
    %c0_i32_0 = arith.constant 0 : i32
    %c0_i32_1 = arith.constant 0 : i32
    return %c0_i32, %c0_i32_0 : i32, i32
  }
  func.func @transform_5(%arg0: i32) -> (i32, i32) {
    %c0_i32 = arith.constant 0 : i32
    %c0_i32_0 = arith.constant 0 : i32
    %c0_i32_1 = arith.constant 0 : i32
    return %c0_i32, %c0_i32_0 : i32, i32
  }
  func.func @transform_6(%arg0: i32) -> (i32, i32) {
    %c0_i32 = arith.constant 0 : i32
    %c0_i32_0 = arith.constant 0 : i32
    %c0_i32_1 = arith.constant 0 : i32
    return %c0_i32, %c0_i32_0 : i32, i32
  }
  func.func @transform_7(%arg0: i32) -> (i32, i32) {
    %c0_i32 = arith.constant 0 : i32
    %c0_i32_0 = arith.constant 0 : i32
    %c0_i32_1 = arith.constant 0 : i32
    return %c0_i32, %c0_i32_0 : i32, i32
  }
  func.func @transform_8(%arg0: i32) -> (i32, i32) {
    %c0_i32 = arith.constant 0 : i32
    %c0_i32_0 = arith.constant 0 : i32
    %c0_i32_1 = arith.constant 0 : i32
    return %c0_i32, %c0_i32_0 : i32, i32
  }
  func.func @transform_9(%arg0: i32) -> (i32, i32) {
    %c0_i32 = arith.constant 0 : i32
    %c0_i32_0 = arith.constant 0 : i32
    %c0_i32_1 = arith.constant 0 : i32
    return %c0_i32, %c0_i32_0 : i32, i32
  }
  func.func @transform_10(%arg0: i32) -> (i32, i32) {
    %c0_i32 = arith.constant 0 : i32
    %c0_i32_0 = arith.constant 0 : i32
    %c0_i32_1 = arith.constant 0 : i32
    return %c0_i32, %c0_i32_0 : i32, i32
  }
  func.func @transform_11(%arg0: i32) -> (i32, i32) {
    %c0_i32 = arith.constant 0 : i32
    %c0_i32_0 = arith.constant 0 : i32
    %c0_i32_1 = arith.constant 0 : i32
    return %c0_i32, %c0_i32_0 : i32, i32
  }
  func.func @transform_12(%arg0: i32) -> (i32, i32) {
    %c0_i32 = arith.constant 0 : i32
    %c0_i32_0 = arith.constant 0 : i32
    %c0_i32_1 = arith.constant 0 : i32
    return %c0_i32, %c0_i32_0 : i32, i32
  }
  func.func @transform_13(%arg0: i32) -> (i32, i32) {
    %c0_i32 = arith.constant 0 : i32
    %c0_i32_0 = arith.constant 0 : i32
    %c0_i32_1 = arith.constant 0 : i32
    return %c0_i32, %c0_i32_0 : i32, i32
  }
  func.func @transform_14(%arg0: i32) -> (i32, i32, i32) {
    %c0_i32 = arith.constant 0 : i32
    %c0_i32_0 = arith.constant 0 : i32
    %c0_i32_1 = arith.constant 0 : i32
    return %arg0, %c0_i32, %c0_i32_0 : i32, i32, i32
  }
}

</mosaic_0001>

<llo_original>
// kernel: tpu_custom_call.1
$region0: #{tpu_custom_call.1}
  #allocation0 [shape = 'u32[]', space=smem, size = 0x4, offset = 0x4, fixed_abs, tag = 'smem constant byte address 0x4 - core index']
  #allocation1 [shape = 'u32[72,128]{1,0:T(1,128)}', space=vmem, size = 0x9000, scoped, tag = 'internal scratch']
  %s0 = inlined_call_operand.vmem [shape: f32[2,16,3], index: 0, kind: input, shape index: {}]
  %s1 = inlined_call_operand.vmem [shape: f32[16,16], index: 1, kind: input, shape index: {}]
  %s2 = inlined_call_operand.hbm [shape: f32[3,8], index: 2, kind: input, shape index: {}]
  %s3 = inlined_call_operand.vmem [shape: f32[1,8], index: 3, kind: input, shape index: {}]
  %s4 = inlined_call_operand.vmem [shape: f32[16,8], index: 4, kind: input, shape index: {}]
  %s5 = inlined_call_operand.vmem [shape: f32[8,8], index: 5, kind: input, shape index: {}]
  %s6 = inlined_call_operand.hbm [shape: f32[1,8], index: 6, kind: input, shape index: {}]
  %s7 = inlined_call_operand.vmem [shape: f32[16,4], index: 7, kind: input, shape index: {}]
  %s8 = inlined_call_operand.hbm [shape: f32[8,8], index: 8, kind: input, shape index: {}]
  %s9 = inlined_call_operand.hbm [shape: f32[1,8], index: 9, kind: input, shape index: {}]
  %s10 = inlined_call_operand.vmem [shape: bf16[16,1024], index: 10, kind: input, shape index: {}]
  %s11 = inlined_call_operand.hbm [shape: f32[1,1024], index: 11, kind: input, shape index: {}]
  %s12 = inlined_call_operand.hbm [shape: bf16[1024,256], index: 12, kind: input, shape index: {}]
  %s13 = inlined_call_operand.vmem [shape: f32[1,256], index: 13, kind: input, shape index: {}]
  %s14 = inlined_call_operand.hbm [shape: f32[2,1,256], index: 14, kind: output, shape index: {}]
  %s15 = sld [smem:[#allocation0]]
  $region113: #{tpu_custom_call.1} parent=0
    _
  %s17 = ssub.s32 1, %s15
  %s18 = scalar_select 0, %s17, %s15
  $region1: #{tpu_custom_call.1} parent=0
    #allocation2 [shape = 'u8[2048]{0}', space=vmem, size = 0x800, scoped, tag = 'input window, operand 2, single buffered']
    #allocation3 [shape = 's32[2]{0}', space=sflag, size = 0x8, scoped, tag = 'scoped memory for tpu_custom_call.1']
    #allocation4 [shape = 's32[2]{0}', space=sflag, size = 0x8, scoped, tag = 'scoped memory for tpu_custom_call.1']
    #allocation5 [shape = 'u8[512]{0}', space=vmem, size = 0x400, scoped, tag = 'input window, operand 6, single buffered']
    #allocation6 [shape = 's32[1]{0}', space=sflag, size = 0x4, scoped, tag = 'scoped memory for tpu_custom_call.1']
    #allocation7 [shape = 'u8[4096]{0}', space=vmem, size = 0x1000, scoped, tag = 'input window, operand 8, single buffered']
    #allocation8 [shape = 'u8[512]{0}', space=vmem, size = 0x400, scoped, tag = 'input window, operand 9, single buffered']
    #allocation9 [shape = 's32[1]{0}', space=sflag, size = 0x4, scoped, tag = 'scoped memory for tpu_custom_call.1']
    #allocation10 [shape = 'u8[4096]{0}', space=vmem, size = 0x1000, scoped, tag = 'input window, operand 11, single buffered']
    #allocation11 [shape = 'u8[524288]{0}', space=vmem, size = 0x80000, scoped, tag = 'input window, operand 12, single buffered']
    #allocation12 [shape = 's32[1]{0}', space=sflag, size = 0x4, scoped, tag = 'scoped memory for tpu_custom_call.1']
    #allocation13 [shape = 'u8[2048]{0}', space=vmem, size = 0x800, scoped, tag = 'output window, operand 0']
    %19 = vsyncpa [#allocation3], 0
    %20 = vsyncpa [#allocation6], 0
    %21 = vsyncpa [#allocation9], 0
    %22 = vsyncpa [#allocation12], 0
    %23 = vsyncpa [#allocation4], 0
    %s24 = scalar_lea.sflag [#allocation4], 1
    %25 = vsyncpa %s24, 0
    loop: start=0, step=1, limit=4
    $region2: #{tpu_custom_call.1} parent=1 // loop_pre_header
      _
    $region3: #{tpu_custom_call.1} parent=1 // loop_header
      %s27 = sphi 0, %s31
      %p28 = scmp.ge.s32.totalorder %s27, 4
      %s37 = sphi 0, %s39
      %s40 = sphi 0, %s37
      %s41 = sphi 0, %s40
      %s57 = sphi 0, %s41
      %s61 = sphi 0, %s61
      %s63 = sphi 0, %s61
      %s64 = sphi 0, %s63
      %s78 = sphi 0, %s64
      %s82 = sphi 0, %s82
      %s84 = sphi 0, %s82
      %s85 = sphi 0, %s84
      %s99 = sphi 0, %s85
      %s103 = sphi 0, %s103
      %s105 = sphi 0, %s103
      %s106 = sphi 0, %s105
      %s120 = sphi 0, %s106
      %s124 = sphi 0, %s124
      %s126 = sphi 0, %s124
      %s127 = sphi 0, %s126
      %s141 = sphi 0, %s127
      %s145 = sphi 0, %s145
      %s147 = sphi 0, %s145
      %s148 = sphi 0, %s147
      %s162 = sphi 0, %s148
      %s166 = sphi 0, %s166
      %s168 = sphi 0, %s166
      %s169 = sphi 0, %s168
      %s183 = sphi 0, %s169
      %s187 = sphi 0, %s187
      %s189 = sphi 0, %s187
      %s190 = sphi 0, %s189
      %s204 = sphi 0, %s190
      %s208 = sphi 0, %s208
      %s210 = sphi 0, %s208
      %s211 = sphi 0, %s210
      %s225 = sphi 0, %s211
      %s229 = sphi 0, %s229
      %s231 = sphi 0, %s229
      %s232 = sphi 0, %s231
      %s246 = sphi 0, %s232
      %s250 = sphi 0, %s250
      %s252 = sphi 0, %s250
      %s253 = sphi 0, %s252
      %s267 = sphi 0, %s253
      %s271 = sphi 0, %s271
      %s273 = sphi 0, %s271
      %s274 = sphi 0, %s273
      %s288 = sphi 0, %s274
      %s292 = sphi 0, %s292
      %s294 = sphi 0, %s292
      %s295 = sphi 0, %s294
      %s309 = sphi 0, %s295
      %s313 = sphi 0, %s313
      %s315 = sphi 0, %s313
      %s316 = sphi 0, %s315
      %s330 = sphi 0, %s316
      %s336 = sphi 0, %s338
      %s339 = sphi 0, %s336
      %s340 = sphi 0, %s339
      %s356 = sphi 0, %s340
    $region4: #{tpu_custom_call.1} parent=1 // loop_header_branch
      %30 = sbr.rel (%p28) target = $region8
    $region5: #{tpu_custom_call.1} parent=1 // loop_body
      %s32 = ssub.s32 %s27, 1
      %s33 = ssub.s32 %s27, 2
      %s34 = sadd.s32 %s27, 1
      %s35 = ssub.s32 %s27, %s34
      %p36 = scmp.eq.s32.totalorder %s35, 0
      %s38 = sadd.s32 %s37, 1
      %s39 = scalar_select %p36, %s37, %s38
      %p42 = pneg %p36
      %p43 = scmp.eq.s32.totalorder %s27, 1
      %p44 = por %p42, %p43
      %p45 = scmp.ne.s32.totalorder %s37, %s40
      %p46 = scmp.eq.s32.totalorder %s27, 0
      %p47 = por %p45, %p46
      %p48 = scmp.ne.s32.totalorder %s37, %s40
      %p49 = scmp.eq.s32.totalorder %s32, 1
      %p50 = por %p48, %p49
      %p51 = scmp.ne.s32.totalorder %s40, %s41
      %p52 = scmp.eq.s32.totalorder %s32, 0
      %p53 = por %p51, %p52
      %p54 = scmp.ne.s32.totalorder %s40, %s41
      %p55 = scmp.eq.s32.totalorder %s33, 1
      %p56 = por %p54, %p55
      %p58 = scmp.ne.s32.totalorder %s41, %s57
      %p59 = scmp.eq.s32.totalorder %s33, 0
      %p60 = por %p58, %p59
      %s62 = sadd.s32 %s61, 1
      %p65 = scmp.eq.s32.totalorder %s27, 1
      %p66 = scmp.ne.s32.totalorder %s61, %s63
      %p67 = scmp.eq.s32.totalorder %s27, 0
      %p68 = por %p66, %p67
      %p69 = scmp.ne.s32.totalorder %s61, %s63
      %p70 = scmp.eq.s32.totalorder %s32, 1
      %p71 = por %p69, %p70
      %p72 = scmp.ne.s32.totalorder %s63, %s64
      %p73 = scmp.eq.s32.totalorder %s32, 0
      %p74 = por %p72, %p73
      %p75 = scmp.ne.s32.totalorder %s63, %s64
      %p76 = scmp.eq.s32.totalorder %s33, 1
      %p77 = por %p75, %p76
      %p79 = scmp.ne.s32.totalorder %s64, %s78
      %p80 = scmp.eq.s32.totalorder %s33, 0
      %p81 = por %p79, %p80
      %s83 = sadd.s32 %s82, 1
      %p86 = scmp.eq.s32.totalorder %s27, 1
      %p87 = scmp.ne.s32.totalorder %s82, %s84
      %p88 = scmp.eq.s32.totalorder %s27, 0
      %p89 = por %p87, %p88
      %p90 = scmp.ne.s32.totalorder %s82, %s84
      %p91 = scmp.eq.s32.totalorder %s32, 1
      %p92 = por %p90, %p91
      %p93 = scmp.ne.s32.totalorder %s84, %s85
      %p94 = scmp.eq.s32.totalorder %s32, 0
      %p95 = por %p93, %p94
      %p96 = scmp.ne.s32.totalorder %s84, %s85
      %p97 = scmp.eq.s32.totalorder %s33, 1
      %p98 = por %p96, %p97
      %p100 = scmp.ne.s32.totalorder %s85, %s99
      %p101 = scmp.eq.s32.totalorder %s33, 0
      %p102 = por %p100, %p101
      %s104 = sadd.s32 %s103, 1
      %p107 = scmp.eq.s32.totalorder %s27, 1
      %p108 = scmp.ne.s32.totalorder %s103, %s105
      %p109 = scmp.eq.s32.totalorder %s27, 0
      %p110 = por %p108, %p109
      %p111 = scmp.ne.s32.totalorder %s103, %s105
      %p112 = scmp.eq.s32.totalorder %s32, 1
      %p113 = por %p111, %p112
      %p114 = scmp.ne.s32.totalorder %s105, %s106
      %p115 = scmp.eq.s32.totalorder %s32, 0
      %p116 = por %p114, %p115
      %p117 = scmp.ne.s32.totalorder %s105, %s106
      %p118 = scmp.eq.s32.totalorder %s33, 1
      %p119 = por %p117, %p118
      %p121 = scmp.ne.s32.totalorder %s106, %s120
      %p122 = scmp.eq.s32.totalorder %s33, 0
      %p123 = por %p121, %p122
      %s125 = sadd.s32 %s124, 1
      %p128 = scmp.eq.s32.totalorder %s27, 1
      %p129 = scmp.ne.s32.totalorder %s124, %s126
      %p130 = scmp.eq.s32.totalorder %s27, 0
      %p131 = por %p129, %p130
      %p132 = scmp.ne.s32.totalorder %s124, %s126
      %p133 = scmp.eq.s32.totalorder %s32, 1
      %p134 = por %p132, %p133
      %p135 = scmp.ne.s32.totalorder %s126, %s127
      %p136 = scmp.eq.s32.totalorder %s32, 0
      %p137 = por %p135, %p136
      %p138 = scmp.ne.s32.totalorder %s126, %s127
      %p139 = scmp.eq.s32.totalorder %s33, 1
      %p140 = por %p138, %p139
      %p142 = scmp.ne.s32.totalorder %s127, %s141
      %p143 = scmp.eq.s32.totalorder %s33, 0
      %p144 = por %p142, %p143
      %s146 = sadd.s32 %s145, 1
      %p149 = scmp.eq.s32.totalorder %s27, 1
      %p150 = scmp.ne.s32.totalorder %s145, %s147
      %p151 = scmp.eq.s32.totalorder %s27, 0
      %p152 = por %p150, %p151
      %p153 = scmp.ne.s32.totalorder %s145, %s147
      %p154 = scmp.eq.s32.totalorder %s32, 1
      %p155 = por %p153, %p154
      %p156 = scmp.ne.s32.totalorder %s147, %s148
      %p157 = scmp.eq.s32.totalorder %s32, 0
      %p158 = por %p156, %p157
      %p159 = scmp.ne.s32.totalorder %s147, %s148
      %p160 = scmp.eq.s32.totalorder %s33, 1
      %p161 = por %p159, %p160
      %p163 = scmp.ne.s32.totalorder %s148, %s162
      %p164 = scmp.eq.s32.totalorder %s33, 0
      %p165 = por %p163, %p164
      %s167 = sadd.s32 %s166, 1
      %p170 = scmp.eq.s32.totalorder %s27, 1
      %p171 = scmp.ne.s32.totalorder %s166, %s168
      %p172 = scmp.eq.s32.totalorder %s27, 0
      %p173 = por %p171, %p172
      %p174 = scmp.ne.s32.totalorder %s166, %s168
      %p175 = scmp.eq.s32.totalorder %s32, 1
      %p176 = por %p174, %p175
      %p177 = scmp.ne.s32.totalorder %s168, %s169
      %p178 = scmp.eq.s32.totalorder %s32, 0
      %p179 = por %p177, %p178
      %p180 = scmp.ne.s32.totalorder %s168, %s169
      %p181 = scmp.eq.s32.totalorder %s33, 1
      %p182 = por %p180, %p181
      %p184 = scmp.ne.s32.totalorder %s169, %s183
      %p185 = scmp.eq.s32.totalorder %s33, 0
      %p186 = por %p184, %p185
      %s188 = sadd.s32 %s187, 1
      %p191 = scmp.eq.s32.totalorder %s27, 1
      %p192 = scmp.ne.s32.totalorder %s187, %s189
      %p193 = scmp.eq.s32.totalorder %s27, 0
      %p194 = por %p192, %p193
      %p195 = scmp.ne.s32.totalorder %s187, %s189
      %p196 = scmp.eq.s32.totalorder %s32, 1
      %p197 = por %p195, %p196
      %p198 = scmp.ne.s32.totalorder %s189, %s190
      %p199 = scmp.eq.s32.totalorder %s32, 0
      %p200 = por %p198, %p199
      %p201 = scmp.ne.s32.totalorder %s189, %s190
      %p202 = scmp.eq.s32.totalorder %s33, 1
      %p203 = por %p201, %p202
      %p205 = scmp.ne.s32.totalorder %s190, %s204
      %p206 = scmp.eq.s32.totalorder %s33, 0
      %p207 = por %p205, %p206
      %s209 = sadd.s32 %s208, 1
      %p212 = scmp.eq.s32.totalorder %s27, 1
      %p213 = scmp.ne.s32.totalorder %s208, %s210
      %p214 = scmp.eq.s32.totalorder %s27, 0
      %p215 = por %p213, %p214
      %p216 = scmp.ne.s32.totalorder %s208, %s210
      %p217 = scmp.eq.s32.totalorder %s32, 1
      %p218 = por %p216, %p217
      %p219 = scmp.ne.s32.totalorder %s210, %s211
      %p220 = scmp.eq.s32.totalorder %s32, 0
      %p221 = por %p219, %p220
      %p222 = scmp.ne.s32.totalorder %s210, %s211
      %p223 = scmp.eq.s32.totalorder %s33, 1
      %p224 = por %p222, %p223
      %p226 = scmp.ne.s32.totalorder %s211, %s225
      %p227 = scmp.eq.s32.totalorder %s33, 0
      %p228 = por %p226, %p227
      %s230 = sadd.s32 %s229, 1
      %p233 = scmp.eq.s32.totalorder %s27, 1
      %p234 = scmp.ne.s32.totalorder %s229, %s231
      %p235 = scmp.eq.s32.totalorder %s27, 0
      %p236 = por %p234, %p235
      %p237 = scmp.ne.s32.totalorder %s229, %s231
      %p238 = scmp.eq.s32.totalorder %s32, 1
      %p239 = por %p237, %p238
      %p240 = scmp.ne.s32.totalorder %s231, %s232
      %p241 = scmp.eq.s32.totalorder %s32, 0
      %p242 = por %p240, %p241
      %p243 = scmp.ne.s32.totalorder %s231, %s232
      %p244 = scmp.eq.s32.totalorder %s33, 1
      %p245 = por %p243, %p244
      %p247 = scmp.ne.s32.totalorder %s232, %s246
      %p248 = scmp.eq.s32.totalorder %s33, 0
      %p249 = por %p247, %p248
      %s251 = sadd.s32 %s250, 1
      %p254 = scmp.eq.s32.totalorder %s27, 1
      %p255 = scmp.ne.s32.totalorder %s250, %s252
      %p256 = scmp.eq.s32.totalorder %s27, 0
      %p257 = por %p255, %p256
      %p258 = scmp.ne.s32.totalorder %s250, %s252
      %p259 = scmp.eq.s32.totalorder %s32, 1
      %p260 = por %p258, %p259
      %p261 = scmp.ne.s32.totalorder %s252, %s253
      %p262 = scmp.eq.s32.totalorder %s32, 0
      %p263 = por %p261, %p262
      %p264 = scmp.ne.s32.totalorder %s252, %s253
      %p265 = scmp.eq.s32.totalorder %s33, 1
      %p266 = por %p264, %p265
      %p268 = scmp.ne.s32.totalorder %s253, %s267
      %p269 = scmp.eq.s32.totalorder %s33, 0
      %p270 = por %p268, %p269
      %s272 = sadd.s32 %s271, 1
      %p275 = scmp.eq.s32.totalorder %s27, 1
      %p276 = scmp.ne.s32.totalorder %s271, %s273
      %p277 = scmp.eq.s32.totalorder %s27, 0
      %p278 = por %p276, %p277
      %p279 = scmp.ne.s32.totalorder %s271, %s273
      %p280 = scmp.eq.s32.totalorder %s32, 1
      %p281 = por %p279, %p280
      %p282 = scmp.ne.s32.totalorder %s273, %s274
      %p283 = scmp.eq.s32.totalorder %s32, 0
      %p284 = por %p282, %p283
      %p285 = scmp.ne.s32.totalorder %s273, %s274
      %p286 = scmp.eq.s32.totalorder %s33, 1
      %p287 = por %p285, %p286
      %p289 = scmp.ne.s32.totalorder %s274, %s288
      %p290 = scmp.eq.s32.totalorder %s33, 0
      %p291 = por %p289, %p290
      %s293 = sadd.s32 %s292, 1
      %p296 = scmp.eq.s32.totalorder %s27, 1
      %p297 = scmp.ne.s32.totalorder %s292, %s294
      %p298 = scmp.eq.s32.totalorder %s27, 0
      %p299 = por %p297, %p298
      %p300 = scmp.ne.s32.totalorder %s292, %s294
      %p301 = scmp.eq.s32.totalorder %s32, 1
      %p302 = por %p300, %p301
      %p303 = scmp.ne.s32.totalorder %s294, %s295
      %p304 = scmp.eq.s32.totalorder %s32, 0
      %p305 = por %p303, %p304
      %p306 = scmp.ne.s32.totalorder %s294, %s295
      %p307 = scmp.eq.s32.totalorder %s33, 1
      %p308 = por %p306, %p307
      %p310 = scmp.ne.s32.totalorder %s295, %s309
      %p311 = scmp.eq.s32.totalorder %s33, 0
      %p312 = por %p310, %p311
      %s314 = sadd.s32 %s313, 1
      %p317 = scmp.eq.s32.totalorder %s27, 1
      %p318 = scmp.ne.s32.totalorder %s313, %s315
      %p319 = scmp.eq.s32.totalorder %s27, 0
      %p320 = por %p318, %p319
      %p321 = scmp.ne.s32.totalorder %s313, %s315
      %p322 = scmp.eq.s32.totalorder %s32, 1
      %p323 = por %p321, %p322
      %p324 = scmp.ne.s32.totalorder %s315, %s316
      %p325 = scmp.eq.s32.totalorder %s32, 0
      %p326 = por %p324, %p325
      %p327 = scmp.ne.s32.totalorder %s315, %s316
      %p328 = scmp.eq.s32.totalorder %s33, 1
      %p329 = por %p327, %p328
      %p331 = scmp.ne.s32.totalorder %s316, %s330
      %p332 = scmp.eq.s32.totalorder %s33, 0
      %p333 = por %p331, %p332
      %s334 = ssub.s32 %s27, %s34
      %p335 = scmp.eq.s32.totalorder %s334, 0
      %s337 = sadd.s32 %s336, 1
      %s338 = scalar_select %p335, %s336, %s337
      %p341 = pneg %p335
      %p342 = scmp.eq.s32.totalorder %s27, 1
      %p343 = por %p341, %p342
      %p344 = scmp.ne.s32.totalorder %s336, %s339
      %p345 = scmp.eq.s32.totalorder %s27, 0
      %p346 = por %p344, %p345
      %p347 = scmp.ne.s32.totalorder %s336, %s339
      %p348 = scmp.eq.s32.totalorder %s32, 1
      %p349 = por %p347, %p348
      %p350 = scmp.ne.s32.totalorder %s339, %s340
      %p351 = scmp.eq.s32.totalorder %s32, 0
      %p352 = por %p350, %p351
      %p353 = scmp.ne.s32.totalorder %s339, %s340
      %p354 = scmp.eq.s32.totalorder %s33, 1
      %p355 = por %p353, %p354
      %p357 = scmp.ne.s32.totalorder %s340, %s356
      %p358 = scmp.eq.s32.totalorder %s33, 0
      %p359 = por %p357, %p358
      %p360 = scmp.le.s32.totalorder 1, %s27
      %p361 = scmp.lt.s32.totalorder %s27, 3
      %p362 = pnand %p360, %p361
      %p363 = pneg %p362
      // Predicated region
      $region9: #{tpu_custom_call.1} parent=5 // pred_check
        _
      $region10: #{tpu_custom_call.1} parent=5 // pred_check_branch
        %365 = sbr.rel (%p362) target = $region12
      $region11: #{tpu_custom_call.1} parent=5 // pred_region
        %s366 = ssub.s32 %s27, 1
        // Predicated region
        $region13: #{tpu_custom_call.1} parent=11 // pred_check
          %p367 = pneg %p74
        $region14: #{tpu_custom_call.1} parent=11 // pred_check_branch
          %369 = sbr.rel (%p367) target = $region16
        $region15: #{tpu_custom_call.1} parent=11 // pred_region
          _
        $region16: #{tpu_custom_call.1} parent=11 // pred_fallthru
          _
        // Predicated region
        $region17: #{tpu_custom_call.1} parent=11 // pred_check
          %p370 = pneg %p95
        $region18: #{tpu_custom_call.1} parent=11 // pred_check_branch
          %372 = sbr.rel (%p370) target = $region20
        $region19: #{tpu_custom_call.1} parent=11 // pred_region
          %374 = vsyncadd [#allocation3], 0
          %s376 = sshll.u32 %s2, 4
          %s377 = int_to_ptr.hbm [resolvable:$true] %s376
          %s378 = sshll.u32 [#allocation2], 4
          %s379 = int_to_ptr.vmem [resolvable:$true] %s378
          %381 = dma.hbm_to_vmem [thread:$0]  %s377, 64, %s379, [#allocation3]
        $region20: #{tpu_custom_call.1} parent=11 // pred_fallthru
          _
        // Predicated region
        $region21: #{tpu_custom_call.1} parent=11 // pred_check
          %p382 = pneg %p116
        $region22: #{tpu_custom_call.1} parent=11 // pred_check_branch
          %384 = sbr.rel (%p382) target = $region24
        $region23: #{tpu_custom_call.1} parent=11 // pred_region
          _
        $region24: #{tpu_custom_call.1} parent=11 // pred_fallthru
          _
        // Predicated region
        $region25: #{tpu_custom_call.1} parent=11 // pred_check
          %p385 = pneg %p137
        $region26: #{tpu_custom_call.1} parent=11 // pred_check_branch
          %387 = sbr.rel (%p385) target = $region28
        $region27: #{tpu_custom_call.1} parent=11 // pred_region
          _
        $region28: #{tpu_custom_call.1} parent=11 // pred_fallthru
          _
        // Predicated region
        $region29: #{tpu_custom_call.1} parent=11 // pred_check
          %p388 = pneg %p158
        $region30: #{tpu_custom_call.1} parent=11 // pred_check_branch
          %390 = sbr.rel (%p388) target = $region32
        $region31: #{tpu_custom_call.1} parent=11 // pred_region
          _
        $region32: #{tpu_custom_call.1} parent=11 // pred_fallthru
          _
        // Predicated region
        $region33: #{tpu_custom_call.1} parent=11 // pred_check
          %p391 = pneg %p179
        $region34: #{tpu_custom_call.1} parent=11 // pred_check_branch
          %393 = sbr.rel (%p391) target = $region36
        $region35: #{tpu_custom_call.1} parent=11 // pred_region
          %395 = vsyncadd [#allocation6], 0
          %s397 = sshll.u32 %s6, 4
          %s398 = int_to_ptr.hbm [resolvable:$true] %s397
          %s399 = sshll.u32 [#allocation5], 4
          %s400 = int_to_ptr.vmem [resolvable:$true] %s399
          %402 = dma.hbm_to_vmem [thread:$0]  %s398, 16, %s400, [#allocation6]
        $region36: #{tpu_custom_call.1} parent=11 // pred_fallthru
          _
        // Predicated region
        $region37: #{tpu_custom_call.1} parent=11 // pred_check
          %p403 = pneg %p200
        $region38: #{tpu_custom_call.1} parent=11 // pred_check_branch
          %405 = sbr.rel (%p403) target = $region40
        $region39: #{tpu_custom_call.1} parent=11 // pred_region
          _
        $region40: #{tpu_custom_call.1} parent=11 // pred_fallthru
          _
        // Predicated region
        $region41: #{tpu_custom_call.1} parent=11 // pred_check
          %p406 = pneg %p221
        $region42: #{tpu_custom_call.1} parent=11 // pred_check_branch
          %408 = sbr.rel (%p406) target = $region44
        $region43: #{tpu_custom_call.1} parent=11 // pred_region
          %410 = vsyncadd [#allocation6], 0
          %s412 = sshll.u32 %s8, 4
          %s413 = int_to_ptr.hbm [resolvable:$true] %s412
          %s414 = sshll.u32 [#allocation7], 4
          %s415 = int_to_ptr.vmem [resolvable:$true] %s414
          %417 = dma.hbm_to_vmem [thread:$0]  %s413, 128, %s415, [#allocation6]
        $region44: #{tpu_custom_call.1} parent=11 // pred_fallthru
          _
        // Predicated region
        $region45: #{tpu_custom_call.1} parent=11 // pred_check
          %p418 = pneg %p242
        $region46: #{tpu_custom_call.1} parent=11 // pred_check_branch
          %420 = sbr.rel (%p418) target = $region48
        $region47: #{tpu_custom_call.1} parent=11 // pred_region
          %422 = vsyncadd [#allocation9], 0
          %s424 = sshll.u32 %s9, 4
          %s425 = int_to_ptr.hbm [resolvable:$true] %s424
          %s426 = sshll.u32 [#allocation8], 4
          %s427 = int_to_ptr.vmem [resolvable:$true] %s426
          %429 = dma.hbm_to_vmem [thread:$0]  %s425, 16, %s427, [#allocation9]
        $region48: #{tpu_custom_call.1} parent=11 // pred_fallthru
          _
        // Predicated region
        $region49: #{tpu_custom_call.1} parent=11 // pred_check
          %p430 = pneg %p263
        $region50: #{tpu_custom_call.1} parent=11 // pred_check_branch
          %432 = sbr.rel (%p430) target = $region52
        $region51: #{tpu_custom_call.1} parent=11 // pred_region
          _
        $region52: #{tpu_custom_call.1} parent=11 // pred_fallthru
          _
        // Predicated region
        $region53: #{tpu_custom_call.1} parent=11 // pred_check
          %p433 = pneg %p284
        $region54: #{tpu_custom_call.1} parent=11 // pred_check_branch
          %435 = sbr.rel (%p433) target = $region56
        $region55: #{tpu_custom_call.1} parent=11 // pred_region
          %437 = vsyncadd [#allocation9], 0
          %s439 = sshll.u32 %s11, 4
          %s440 = int_to_ptr.hbm [resolvable:$true] %s439
          %s441 = sshll.u32 [#allocation10], 4
          %s442 = int_to_ptr.vmem [resolvable:$true] %s441
          %444 = dma.hbm_to_vmem [thread:$0]  %s440, 128, %s442, [#allocation9]
        $region56: #{tpu_custom_call.1} parent=11 // pred_fallthru
          _
        // Predicated region
        $region57: #{tpu_custom_call.1} parent=11 // pred_check
          %p445 = pneg %p305
        $region58: #{tpu_custom_call.1} parent=11 // pred_check_branch
          %447 = sbr.rel (%p445) target = $region60
        $region59: #{tpu_custom_call.1} parent=11 // pred_region
          %449 = vsyncadd [#allocation12], 0
          %s450 = sshll.u32 %s12, 4
          %s451 = int_to_ptr.hbm [resolvable:$true] %s450
          %s452 = sshll.u32 [#allocation11], 4
          %s453 = int_to_ptr.vmem [resolvable:$true] %s452
          %458 = dma.hbm_to_vmem [thread:$0]  %s451, 16384, %s453, [#allocation12], 128, 128, 8
        $region60: #{tpu_custom_call.1} parent=11 // pred_fallthru
          _
        // Predicated region
        $region61: #{tpu_custom_call.1} parent=11 // pred_check
          %p459 = pneg %p326
        $region62: #{tpu_custom_call.1} parent=11 // pred_check_branch
          %461 = sbr.rel (%p459) target = $region64
        $region63: #{tpu_custom_call.1} parent=11 // pred_region
          _
        $region64: #{tpu_custom_call.1} parent=11 // pred_fallthru
          _
      $region12: #{tpu_custom_call.1} parent=5 // pred_fallthru
        _
      %p462 = scmp.lt.s32.totalorder %s27, 2
      // Predicated region
      $region65: #{tpu_custom_call.1} parent=5 // pred_check
        %p463 = pneg %p462
      $region66: #{tpu_custom_call.1} parent=5 // pred_check_branch
        %465 = sbr.rel (%p463) target = $region68
      $region67: #{tpu_custom_call.1} parent=5 // pred_region
        // Predicated region
        $region69: #{tpu_custom_call.1} parent=67 // pred_check
          %p466 = pneg %p47
        $region70: #{tpu_custom_call.1} parent=67 // pred_check_branch
          %468 = sbr.rel (%p466) target = $region72
        $region71: #{tpu_custom_call.1} parent=67 // pred_region
          %p469 = scmp.lt.s32.totalorder %s27, 1
          %s470 = scalar_select %p469, %s27, 1
          %s471 = smul.addr %s470, 2
          %s472 = smul.addr %s471, 8
          %s473 = scalar_lea.vmem %s0, %s472
        $region72: #{tpu_custom_call.1} parent=67 // pred_fallthru
          _
      $region68: #{tpu_custom_call.1} parent=5 // pred_fallthru
        _
      %p474 = scmp.le.s32.totalorder 1, %s27
      %p475 = scmp.lt.s32.totalorder %s27, 3
      %p476 = pnand %p474, %p475
      %p477 = pneg %p476
      // Predicated region
      $region73: #{tpu_custom_call.1} parent=5 // pred_check
        _
      $region74: #{tpu_custom_call.1} parent=5 // pred_check_branch
        %479 = sbr.rel (%p476) target = $region76
      $region75: #{tpu_custom_call.1} parent=5 // pred_region
        %s480 = ssub.s32 %s27, 1
        // Predicated region
        $region77: #{tpu_custom_call.1} parent=75 // pred_check
          %p481 = pneg %p95
        $region78: #{tpu_custom_call.1} parent=75 // pred_check_branch
          %483 = sbr.rel (%p481) target = $region80
        $region79: #{tpu_custom_call.1} parent=75 // pred_region
          %485 = dma.done [#allocation3], 64
        $region80: #{tpu_custom_call.1} parent=75 // pred_fallthru
          _
        // Predicated region
        $region81: #{tpu_custom_call.1} parent=75 // pred_check
          %p486 = pneg %p179
        $region82: #{tpu_custom_call.1} parent=75 // pred_check_branch
          %488 = sbr.rel (%p486) target = $region84
        $region83: #{tpu_custom_call.1} parent=75 // pred_region
          %490 = dma.done [#allocation6], 16
        $region84: #{tpu_custom_call.1} parent=75 // pred_fallthru
          _
        // Predicated region
        $region85: #{tpu_custom_call.1} parent=75 // pred_check
          %p491 = pneg %p221
        $region86: #{tpu_custom_call.1} parent=75 // pred_check_branch
          %493 = sbr.rel (%p491) target = $region88
        $region87: #{tpu_custom_call.1} parent=75 // pred_region
          %495 = dma.done [#allocation6], 128
        $region88: #{tpu_custom_call.1} parent=75 // pred_fallthru
          _
        // Predicated region
        $region89: #{tpu_custom_call.1} parent=75 // pred_check
          %p496 = pneg %p242
        $region90: #{tpu_custom_call.1} parent=75 // pred_check_branch
          %498 = sbr.rel (%p496) target = $region92
        $region91: #{tpu_custom_call.1} parent=75 // pred_region
          %500 = dma.done [#allocation9], 16
        $region92: #{tpu_custom_call.1} parent=75 // pred_fallthru
          _
        // Predicated region
        $region93: #{tpu_custom_call.1} parent=75 // pred_check
          %p501 = pneg %p284
        $region94: #{tpu_custom_call.1} parent=75 // pred_check_branch
          %503 = sbr.rel (%p501) target = $region96
        $region95: #{tpu_custom_call.1} parent=75 // pred_region
          %505 = dma.done [#allocation9], 128
        $region96: #{tpu_custom_call.1} parent=75 // pred_fallthru
          _
        // Predicated region
        $region97: #{tpu_custom_call.1} parent=75 // pred_check
          %p506 = pneg %p305
        $region98: #{tpu_custom_call.1} parent=75 // pred_check_branch
          %508 = sbr.rel (%p506) target = $region100
        $region99: #{tpu_custom_call.1} parent=75 // pred_region
          %510 = dma.done [#allocation12], 16384
        $region100: #{tpu_custom_call.1} parent=75 // pred_fallthru
          _
        %p511 = scmp.lt.s32.totalorder %s32, 1
        %s512 = scalar_select %p511, %s32, 1
        %s513 = smul.addr %s512, 2
        %s514 = smul.addr %s513, 8
        %s515 = scalar_lea.vmem %s0, %s514
        %p516 = pneg %p53
        %p517 = pneg %p50
        %p518 = pneg %p74
        %p519 = pneg %p71
        %p520 = pneg %p95
        %p521 = pneg %p92
        %p522 = pneg %p116
        %p523 = pneg %p113
        %p524 = pneg %p137
        %p525 = pneg %p134
        %p526 = pneg %p158
        %p527 = pneg %p155
        %p528 = pneg %p179
        %p529 = pneg %p176
        %p530 = pneg %p200
        %p531 = pneg %p197
        %p532 = pneg %p221
        %p533 = pneg %p218
        %p534 = pneg %p242
        %p535 = pneg %p239
        %p536 = pneg %p263
        %p537 = pneg %p260
        %p538 = pneg %p284
        %p539 = pneg %p281
        %p540 = pneg %p305
        %p541 = pneg %p302
        %p542 = pneg %p326
        %p543 = pneg %p323
        %p544 = pneg %p352
        %p545 = pneg %p349
        %s546 = sand.u32 %s339, 1
        %s547 = scalar_lea.sflag [#allocation4], %s546
        %s548 = sand.u32 %s339, 1
        %s549 = smul.addr %s548, 2
        %s550 = scalar_lea.vmem [#allocation13], %s549
        %p551 = scmp.lt.s32.totalorder %s32, 1
        %s552 = scalar_select %p551, %s32, 1
        %s553 = smul.addr %s552, 2
        %s554 = smul.addr %s553, 8
        %s555 = scalar_lea.vmem %s0, %s554
        %v557 = vld [vmem:[%s555] sm:$0xff]
        %v558 = vld [vmem:[%s555 + $0x8] sm:$0xff]
        %v559 = vld [vmem:[%s1] sm:$0xff]
        %v560 = vld [vmem:[%s1 + $0x8] sm:$0xff]
        %vm561 = vcmask 130048
        %v563 = vsel %vm561, %v559, 0
        %v566 = vsel %vm561, %v560, 0
        %568 = vmatpush.msra.mxu0 0.0
        %569 = vmatpush.msra.mxu0 0.0
        %570 = vmatpush.msra.mxu0 0.0
        %571 = vmatpush.msra.mxu0 0.0
        %572 = vmatpush.msra.mxu0 0.0
        %573 = vmatpush.msra.mxu0 0.0
        %574 = vmatpush.msra.mxu0 0.0
        %575 = vmatpush.msra.mxu0 0.0
        %576 = vmatpush.msra.mxu0 0.0
        %577 = vmatpush.msra.mxu0 0.0
        %578 = vmatpush.msra.mxu0 0.0
        %579 = vmatpush.msra.mxu0 0.0
        %580 = vmatpush.msra.mxu0 0.0
        %581 = vmatpush.msra.mxu0 0.0
        %582 = vmatpush.msra.mxu0 %v558
        %583 = vmatpush.msra.mxu0 %v557
        %584 = vmatmul.f32.gmra.mxu0 %v563
        %v585 = vpop.f32.mrf.mxu0
        %v586 = vadd.f32 0.0, %v585
        %587 = vmatmul.f32.gmra.mxu0 %v566
        %v588 = vpop.f32.mrf.mxu0
        %v589 = vadd.f32 0.0, %v588
        %590 = vdwg.mxu0
        %v591 = vld [vmem:[#allocation2] sm:$0x7]
        %vm592 = vcmask 23552
        %v594 = vsel %vm592, %v586, 0
        %v597 = vsel %vm592, %v589, 0
        %vm599 = vcmask 1042432
        %v601 = vsel %vm599, %v591, 0
        %603 = vmatpush.msra.mxu0 0.0
        %604 = vmatpush.msra.mxu0 0.0
        %605 = vmatpush.msra.mxu0 0.0
        %606 = vmatpush.msra.mxu0 0.0
        %607 = vmatpush.msra.mxu0 0.0
        %608 = vmatpush.msra.mxu0 0.0
        %609 = vmatpush.msra.mxu0 0.0
        %610 = vmatpush.msra.mxu0 0.0
        %611 = vmatpush.msra.mxu0 0.0
        %612 = vmatpush.msra.mxu0 0.0
        %613 = vmatpush.msra.mxu0 0.0
        %614 = vmatpush.msra.mxu0 0.0
        %615 = vmatpush.msra.mxu0 0.0
        %616 = vmatpush.msra.mxu0 0.0
        %617 = vmatpush.msra.mxu0 0.0
        %618 = vmatpush.msra.mxu0 %v601
        %619 = vmatmul.f32.gmra.mxu0 %v594
        %v620 = vpop.f32.mrf.mxu0
        %v621 = vadd.f32 0.0, %v620
        %622 = vmatmul.f32.gmra.mxu0 %v597
        %v623 = vpop.f32.mrf.mxu0
        %v624 = vadd.f32 0.0, %v623
        %625 = vdwg.mxu0
        %v626 = vmax.f32 %v621, %v624
        %v627 = vld [vmem:[%s3] sm:$0x1]
        %v629 = vperm.slane %v627, 0
        %v631 = vadd.f32 %v626, %v629
        %v632 = vmax.f32 %v631, 0.0
        %v633 = vld [vmem:[%s4] sm:$0xff]
        %v634 = vld [vmem:[%s4 + $0x8] sm:$0xff]
        %v635 = vld [vmem:[%s5] sm:$0xff]
        %vm636 = vcmask 64512
        %v638 = vsel %vm636, %v632, 0
        %640 = vmatpush.msra.mxu0 0.0
        %641 = vmatpush.msra.mxu0 0.0
        %642 = vmatpush.msra.mxu0 0.0
        %643 = vmatpush.msra.mxu0 0.0
        %644 = vmatpush.msra.mxu0 0.0
        %645 = vmatpush.msra.mxu0 0.0
        %646 = vmatpush.msra.mxu0 0.0
        %647 = vmatpush.msra.mxu0 0.0
        %648 = vmatpush.msra.mxu0 0.0
        %649 = vmatpush.msra.mxu0 0.0
        %650 = vmatpush.msra.mxu0 0.0
        %651 = vmatpush.msra.mxu0 0.0
        %652 = vmatpush.msra.mxu0 0.0
        %653 = vmatpush.msra.mxu0 0.0
        %654 = vmatpush.msra.mxu0 0.0
        %655 = vmatpush.msra.mxu0 %v635
        %656 = vmatmul.f32.gmra.mxu0 %v638
        %v657 = vpop.f32.mrf.mxu0
        %v658 = vadd.f32 0.0, %v657
        %659 = vdwg.mxu0
        %v661 = vsel %vm636, %v633, 0
        %v664 = vsel %vm636, %v634, 0
        %666 = vmatpush.msra.mxu0 0.0
        %667 = vmatpush.msra.mxu0 0.0
        %668 = vmatpush.msra.mxu0 0.0
        %669 = vmatpush.msra.mxu0 0.0
        %670 = vmatpush.msra.mxu0 0.0
        %671 = vmatpush.msra.mxu0 0.0
        %672 = vmatpush.msra.mxu0 0.0
        %673 = vmatpush.msra.mxu0 0.0
        %674 = vmatpush.msra.mxu0 0.0
        %675 = vmatpush.msra.mxu0 0.0
        %676 = vmatpush.msra.mxu0 0.0
        %677 = vmatpush.msra.mxu0 0.0
        %678 = vmatpush.msra.mxu0 0.0
        %679 = vmatpush.msra.mxu0 0.0
        %680 = vmatpush.msra.mxu0 0.0
        %681 = vmatpush.msra.mxu0 %v658
        %682 = vmatmul.f32.gmra.mxu0 %v661
        %v683 = vpop.f32.mrf.mxu0
        %v684 = vadd.f32 0.0, %v683
        %685 = vmatmul.f32.gmra.mxu0 %v664
        %v686 = vpop.f32.mrf.mxu0
        %v687 = vadd.f32 0.0, %v686
        %688 = vdwg.mxu0
        %v689 = vmax.f32 %v684, %v687
        %v690 = vld [vmem:[#allocation5] sm:$0x1]
        %v692 = vperm.slane %v690, 0
        %v694 = vadd.f32 %v689, %v692
        %v695 = vmax.f32 %v694, 0.0
        %v696 = vld [vmem:[%s7] sm:$0xff]
        %v697 = vld [vmem:[%s7 + $0x8] sm:$0xff]
        %v698 = vld [vmem:[#allocation7] sm:$0xff]
        %v700 = vsel %vm636, %v695, 0
        %702 = vmatpush.msra.mxu0 0.0
        %703 = vmatpush.msra.mxu0 0.0
        %704 = vmatpush.msra.mxu0 0.0
        %705 = vmatpush.msra.mxu0 0.0
        %706 = vmatpush.msra.mxu0 0.0
        %707 = vmatpush.msra.mxu0 0.0
        %708 = vmatpush.msra.mxu0 0.0
        %709 = vmatpush.msra.mxu0 0.0
        %710 = vmatpush.msra.mxu0 0.0
        %711 = vmatpush.msra.mxu0 0.0
        %712 = vmatpush.msra.mxu0 0.0
        %713 = vmatpush.msra.mxu0 0.0
        %714 = vmatpush.msra.mxu0 0.0
        %715 = vmatpush.msra.mxu0 0.0
        %716 = vmatpush.msra.mxu0 0.0
        %717 = vmatpush.msra.mxu0 %v698
        %718 = vmatmul.f32.gmra.mxu0 %v700
        %v719 = vpop.f32.mrf.mxu0
        %v720 = vadd.f32 0.0, %v719
        %721 = vdwg.mxu0
        %vm722 = vcmask 31744
        %v724 = vsel %vm722, %v696, 0
        %v727 = vsel %vm722, %v697, 0
        %vm729 = vcmask 1043456
        %v731 = vsel %vm729, %v720, 0
        %733 = vmatpush.msra.mxu0 0.0
        %734 = vmatpush.msra.mxu0 0.0
        %735 = vmatpush.msra.mxu0 0.0
        %736 = vmatpush.msra.mxu0 0.0
        %737 = vmatpush.msra.mxu0 0.0
        %738 = vmatpush.msra.mxu0 0.0
        %739 = vmatpush.msra.mxu0 0.0
        %740 = vmatpush.msra.mxu0 0.0
        %741 = vmatpush.msra.mxu0 0.0
        %742 = vmatpush.msra.mxu0 0.0
        %743 = vmatpush.msra.mxu0 0.0
        %744 = vmatpush.msra.mxu0 0.0
        %745 = vmatpush.msra.mxu0 0.0
        %746 = vmatpush.msra.mxu0 0.0
        %747 = vmatpush.msra.mxu0 0.0
        %748 = vmatpush.msra.mxu0 %v731
        %749 = vmatmul.f32.gmra.mxu0 %v724
        %v750 = vpop.f32.mrf.mxu0
        %v751 = vadd.f32 0.0, %v750
        %752 = vmatmul.f32.gmra.mxu0 %v727
        %v753 = vpop.f32.mrf.mxu0
        %v754 = vadd.f32 0.0, %v753
        %755 = vdwg.mxu0
        %v756 = vmax.f32 %v751, %v754
        %v757 = vld [vmem:[#allocation8] sm:$0x1]
        %v759 = vperm.slane %v757, 0
        %v761 = vadd.f32 %v756, %v759
        %v762 = vmax.f32 %v761, 0.0
        %v763 = vld [vmem:[#allocation10] sm:$0xff]
        %v764 = vpack.c.bf16 %v762, %v762
        %v765 = vld [vmem:[%s10] sm:$0xff]
        %v766 = vld [vmem:[%s10 + $0x8] sm:$0xff]
        %v767 = vld [vmem:[%s10 + $0x10] sm:$0xff]
        %v768 = vld [vmem:[%s10 + $0x18] sm:$0xff]
        %v773 = vunpack.c.l.b16 %v765
        %v774 = vunpack.c.h.b16 %v765
        %v775 = vunpack.c.l.b16 %v766
        %v776 = vunpack.c.h.b16 %v766
        %v777 = vunpack.c.l.b16 %v767
        %v778 = vunpack.c.h.b16 %v767
        %v779 = vunpack.c.l.b16 %v768
        %v780 = vunpack.c.h.b16 %v768
        %v781 = vpack.c.b16 %v773, %v773
        %v782 = vpack.c.b16 %v774, %v774
        %v783 = vpack.c.b16 %v775, %v775
        %v784 = vpack.c.b16 %v776, %v776
        %v785 = vpack.c.b16 %v777, %v777
        %v786 = vpack.c.b16 %v778, %v778
        %v787 = vpack.c.b16 %v779, %v779
        %v788 = vpack.c.b16 %v780, %v780
        %v790 = vsel %vm636, %v764, 0
        %v793 = vsel %vm729, %v781, 0
        %v796 = vsel %vm729, %v782, 0
        %v799 = vsel %vm729, %v783, 0
        %v802 = vsel %vm729, %v784, 0
        %v805 = vsel %vm729, %v785, 0
        %v808 = vsel %vm729, %v786, 0
        %v811 = vsel %vm729, %v787, 0
        %v814 = vsel %vm729, %v788, 0
        %816 = vmatpush.bf16.msra.mxu0 0
        %817 = vmatpush.bf16.msra.mxu0 0
        %818 = vmatpush.bf16.msra.mxu0 0
        %819 = vmatpush.bf16.msra.mxu0 0
        %820 = vmatpush.bf16.msra.mxu0 0
        %821 = vmatpush.bf16.msra.mxu0 0
        %822 = vmatpush.bf16.msra.mxu0 0
        %823 = vmatpush.bf16.msra.mxu0 %v793
        %824 = vmatmul.bf16.gmra.mxu0 %v790
        %v825 = vpop.f32.mrf.mxu0
        %v826 = vadd.f32 0.0, %v825
        %v827 = vpop.f32.mrf.mxu0
        %828 = vdwg.mxu0
        %829 = vmatpush.bf16.msra.mxu0 0
        %830 = vmatpush.bf16.msra.mxu0 0
        %831 = vmatpush.bf16.msra.mxu0 0
        %832 = vmatpush.bf16.msra.mxu0 0
        %833 = vmatpush.bf16.msra.mxu0 0
        %834 = vmatpush.bf16.msra.mxu0 0
        %835 = vmatpush.bf16.msra.mxu0 0
        %836 = vmatpush.bf16.msra.mxu0 %v796
        %837 = vmatmul.bf16.gmra.mxu0 %v790
        %v838 = vpop.f32.mrf.mxu0
        %v839 = vadd.f32 0.0, %v838
        %v840 = vpop.f32.mrf.mxu0
        %841 = vdwg.mxu0
        %842 = vmatpush.bf16.msra.mxu0 0
        %843 = vmatpush.bf16.msra.mxu0 0
        %844 = vmatpush.bf16.msra.mxu0 0
        %845 = vmatpush.bf16.msra.mxu0 0
        %846 = vmatpush.bf16.msra.mxu0 0
        %847 = vmatpush.bf16.msra.mxu0 0
        %848 = vmatpush.bf16.msra.mxu0 0
        %849 = vmatpush.bf16.msra.mxu0 %v799
        %850 = vmatmul.bf16.gmra.mxu0 %v790
        %v851 = vpop.f32.mrf.mxu0
        %v852 = vadd.f32 0.0, %v851
        %v853 = vpop.f32.mrf.mxu0
        %854 = vdwg.mxu0
        %855 = vmatpush.bf16.msra.mxu0 0
        %856 = vmatpush.bf16.msra.mxu0 0
        %857 = vmatpush.bf16.msra.mxu0 0
        %858 = vmatpush.bf16.msra.mxu0 0
        %859 = vmatpush.bf16.msra.mxu0 0
        %860 = vmatpush.bf16.msra.mxu0 0
        %861 = vmatpush.bf16.msra.mxu0 0
        %862 = vmatpush.bf16.msra.mxu0 %v802
        %863 = vmatmul.bf16.gmra.mxu0 %v790
        %v864 = vpop.f32.mrf.mxu0
        %v865 = vadd.f32 0.0, %v864
        %v866 = vpop.f32.mrf.mxu0
        %867 = vdwg.mxu0
        %868 = vmatpush.bf16.msra.mxu0 0
        %869 = vmatpush.bf16.msra.mxu0 0
        %870 = vmatpush.bf16.msra.mxu0 0
        %871 = vmatpush.bf16.msra.mxu0 0
        %872 = vmatpush.bf16.msra.mxu0 0
        %873 = vmatpush.bf16.msra.mxu0 0
        %874 = vmatpush.bf16.msra.mxu0 0
        %875 = vmatpush.bf16.msra.mxu0 %v805
        %876 = vmatmul.bf16.gmra.mxu0 %v790
        %v877 = vpop.f32.mrf.mxu0
        %v878 = vadd.f32 0.0, %v877
        %v879 = vpop.f32.mrf.mxu0
        %880 = vdwg.mxu0
        %881 = vmatpush.bf16.msra.mxu0 0
        %882 = vmatpush.bf16.msra.mxu0 0
        %883 = vmatpush.bf16.msra.mxu0 0
        %884 = vmatpush.bf16.msra.mxu0 0
        %885 = vmatpush.bf16.msra.mxu0 0
        %886 = vmatpush.bf16.msra.mxu0 0
        %887 = vmatpush.bf16.msra.mxu0 0
        %888 = vmatpush.bf16.msra.mxu0 %v808
        %889 = vmatmul.bf16.gmra.mxu0 %v790
        %v890 = vpop.f32.mrf.mxu0
        %v891 = vadd.f32 0.0, %v890
        %v892 = vpop.f32.mrf.mxu0
        %893 = vdwg.mxu0
        %894 = vmatpush.bf16.msra.mxu0 0
        %895 = vmatpush.bf16.msra.mxu0 0
        %896 = vmatpush.bf16.msra.mxu0 0
        %897 = vmatpush.bf16.msra.mxu0 0
        %898 = vmatpush.bf16.msra.mxu0 0
        %899 = vmatpush.bf16.msra.mxu0 0
        %900 = vmatpush.bf16.msra.mxu0 0
        %901 = vmatpush.bf16.msra.mxu0 %v811
        %902 = vmatmul.bf16.gmra.mxu0 %v790
        %v903 = vpop.f32.mrf.mxu0
        %v904 = vadd.f32 0.0, %v903
        %v905 = vpop.f32.mrf.mxu0
        %906 = vdwg.mxu0
        %907 = vmatpush.bf16.msra.mxu0 0
        %908 = vmatpush.bf16.msra.mxu0 0
        %909 = vmatpush.bf16.msra.mxu0 0
        %910 = vmatpush.bf16.msra.mxu0 0
        %911 = vmatpush.bf16.msra.mxu0 0
        %912 = vmatpush.bf16.msra.mxu0 0
        %913 = vmatpush.bf16.msra.mxu0 0
        %914 = vmatpush.bf16.msra.mxu0 %v814
        %915 = vmatmul.bf16.gmra.mxu0 %v790
        %v916 = vpop.f32.mrf.mxu0
        %v917 = vadd.f32 0.0, %v916
        %v918 = vpop.f32.mrf.mxu0
        %919 = vdwg.mxu0
        %v928 = vrot.slane %v839, 7
        %v929 = vrot.slane %v852, 6
        %v930 = vrot.slane %v865, 5
        %v931 = vrot.slane %v878, 4
        %v932 = vrot.slane %v891, 3
        %v933 = vrot.slane %v904, 2
        %v934 = vrot.slane %v917, 1
        %vm935 = vcmask 1040384
        %v936 = vsel %vm935, %v826, %v928
        %vm937 = vcmask 1042434
        %v938 = vsel %vm937, %v929, %v930
        %vm939 = vcmask 1041408
        %v940 = vsel %vm939, %v936, %v938
        %vm941 = vcmask 1044484
        %v942 = vsel %vm941, %v931, %v932
        %vm943 = vcmask 1046534
        %v944 = vsel %vm943, %v933, %v934
        %vm945 = vcmask 1045508
        %v946 = vsel %vm945, %v942, %v944
        %v947 = vsel %vm729, %v940, %v946
        %v949 = vadd.f32 %v763, %v947
        %v950 = vld [vmem:[%s10 + $0x20] sm:$0xff]
        %v951 = vld [vmem:[%s10 + $0x28] sm:$0xff]
        %v952 = vld [vmem:[%s10 + $0x30] sm:$0xff]
        %v953 = vld [vmem:[%s10 + $0x38] sm:$0xff]
        %v954 = vshrl.u32 %v764, 16
        %v960 = vunpack.c.l.b16 %v950
        %v961 = vunpack.c.h.b16 %v950
        %v962 = vunpack.c.l.b16 %v951
        %v963 = vunpack.c.h.b16 %v951
        %v964 = vunpack.c.l.b16 %v952
        %v965 = vunpack.c.h.b16 %v952
        %v966 = vunpack.c.l.b16 %v953
        %v967 = vunpack.c.h.b16 %v953
        %v968 = vpack.c.b16 %v960, %v960
        %v969 = vpack.c.b16 %v961, %v961
        %v970 = vpack.c.b16 %v962, %v962
        %v971 = vpack.c.b16 %v963, %v963
        %v972 = vpack.c.b16 %v964, %v964
        %v973 = vpack.c.b16 %v965, %v965
        %v974 = vpack.c.b16 %v966, %v966
        %v975 = vpack.c.b16 %v967, %v967
        %v977 = vsel %vm636, %v954, 0
        %v980 = vsel %vm729, %v968, 0
        %v983 = vsel %vm729, %v969, 0
        %v986 = vsel %vm729, %v970, 0
        %v989 = vsel %vm729, %v971, 0
        %v992 = vsel %vm729, %v972, 0
        %v995 = vsel %vm729, %v973, 0
        %v998 = vsel %vm729, %v974, 0
        %v1001 = vsel %vm729, %v975, 0
        %1003 = vmatpush.bf16.msra.mxu0 0
        %1004 = vmatpush.bf16.msra.mxu0 0
        %1005 = vmatpush.bf16.msra.mxu0 0
        %1006 = vmatpush.bf16.msra.mxu0 0
        %1007 = vmatpush.bf16.msra.mxu0 0
        %1008 = vmatpush.bf16.msra.mxu0 0
        %1009 = vmatpush.bf16.msra.mxu0 0
        %1010 = vmatpush.bf16.msra.mxu0 %v980
        %1011 = vmatmul.bf16.gmra.mxu0 %v977
        %v1012 = vpop.f32.mrf.mxu0
        %v1013 = vadd.f32 0.0, %v1012
        %v1014 = vpop.f32.mrf.mxu0
        %1015 = vdwg.mxu0
        %1016 = vmatpush.bf16.msra.mxu0 0
        %1017 = vmatpush.bf16.msra.mxu0 0
        %1018 = vmatpush.bf16.msra.mxu0 0
        %1019 = vmatpush.bf16.msra.mxu0 0
        %1020 = vmatpush.bf16.msra.mxu0 0
        %1021 = vmatpush.bf16.msra.mxu0 0
        %1022 = vmatpush.bf16.msra.mxu0 0
        %1023 = vmatpush.bf16.msra.mxu0 %v983
        %1024 = vmatmul.bf16.gmra.mxu0 %v977
        %v1025 = vpop.f32.mrf.mxu0
        %v1026 = vadd.f32 0.0, %v1025
        %v1027 = vpop.f32.mrf.mxu0
        %1028 = vdwg.mxu0
        %1029 = vmatpush.bf16.msra.mxu0 0
        %1030 = vmatpush.bf16.msra.mxu0 0
        %1031 = vmatpush.bf16.msra.mxu0 0
        %1032 = vmatpush.bf16.msra.mxu0 0
        %1033 = vmatpush.bf16.msra.mxu0 0
        %1034 = vmatpush.bf16.msra.mxu0 0
        %1035 = vmatpush.bf16.msra.mxu0 0
        %1036 = vmatpush.bf16.msra.mxu0 %v986
        %1037 = vmatmul.bf16.gmra.mxu0 %v977
        %v1038 = vpop.f32.mrf.mxu0
        %v1039 = vadd.f32 0.0, %v1038
        %v1040 = vpop.f32.mrf.mxu0
        %1041 = vdwg.mxu0
        %1042 = vmatpush.bf16.msra.mxu0 0
        %1043 = vmatpush.bf16.msra.mxu0 0
        %1044 = vmatpush.bf16.msra.mxu0 0
        %1045 = vmatpush.bf16.msra.mxu0 0
        %1046 = vmatpush.bf16.msra.mxu0 0
        %1047 = vmatpush.bf16.msra.mxu0 0
        %1048 = vmatpush.bf16.msra.mxu0 0
        %1049 = vmatpush.bf16.msra.mxu0 %v989
        %1050 = vmatmul.bf16.gmra.mxu0 %v977
        %v1051 = vpop.f32.mrf.mxu0
        %v1052 = vadd.f32 0.0, %v1051
        %v1053 = vpop.f32.mrf.mxu0
        %1054 = vdwg.mxu0
        %1055 = vmatpush.bf16.msra.mxu0 0
        %1056 = vmatpush.bf16.msra.mxu0 0
        %1057 = vmatpush.bf16.msra.mxu0 0
        %1058 = vmatpush.bf16.msra.mxu0 0
        %1059 = vmatpush.bf16.msra.mxu0 0
        %1060 = vmatpush.bf16.msra.mxu0 0
        %1061 = vmatpush.bf16.msra.mxu0 0
        %1062 = vmatpush.bf16.msra.mxu0 %v992
        %1063 = vmatmul.bf16.gmra.mxu0 %v977
        %v1064 = vpop.f32.mrf.mxu0
        %v1065 = vadd.f32 0.0, %v1064
        %v1066 = vpop.f32.mrf.mxu0
        %1067 = vdwg.mxu0
        %1068 = vmatpush.bf16.msra.mxu0 0
        %1069 = vmatpush.bf16.msra.mxu0 0
        %1070 = vmatpush.bf16.msra.mxu0 0
        %1071 = vmatpush.bf16.msra.mxu0 0
        %1072 = vmatpush.bf16.msra.mxu0 0
        %1073 = vmatpush.bf16.msra.mxu0 0
        %1074 = vmatpush.bf16.msra.mxu0 0
        %1075 = vmatpush.bf16.msra.mxu0 %v995
        %1076 = vmatmul.bf16.gmra.mxu0 %v977
        %v1077 = vpop.f32.mrf.mxu0
        %v1078 = vadd.f32 0.0, %v1077
        %v1079 = vpop.f32.mrf.mxu0
        %1080 = vdwg.mxu0
        %1081 = vmatpush.bf16.msra.mxu0 0
        %1082 = vmatpush.bf16.msra.mxu0 0
        %1083 = vmatpush.bf16.msra.mxu0 0
        %1084 = vmatpush.bf16.msra.mxu0 0
        %1085 = vmatpush.bf16.msra.mxu0 0
        %1086 = vmatpush.bf16.msra.mxu0 0
        %1087 = vmatpush.bf16.msra.mxu0 0
        %1088 = vmatpush.bf16.msra.mxu0 %v998
        %1089 = vmatmul.bf16.gmra.mxu0 %v977
        %v1090 = vpop.f32.mrf.mxu0
        %v1091 = vadd.f32 0.0, %v1090
        %v1092 = vpop.f32.mrf.mxu0
        %1093 = vdwg.mxu0
        %1094 = vmatpush.bf16.msra.mxu0 0
        %1095 = vmatpush.bf16.msra.mxu0 0
        %1096 = vmatpush.bf16.msra.mxu0 0
        %1097 = vmatpush.bf16.msra.mxu0 0
        %1098 = vmatpush.bf16.msra.mxu0 0
        %1099 = vmatpush.bf16.msra.mxu0 0
        %1100 = vmatpush.bf16.msra.mxu0 0
        %1101 = vmatpush.bf16.msra.mxu0 %v1001
        %1102 = vmatmul.bf16.gmra.mxu0 %v977
        %v1103 = vpop.f32.mrf.mxu0
        %v1104 = vadd.f32 0.0, %v1103
        %v1105 = vpop.f32.mrf.mxu0
        %1106 = vdwg.mxu0
        %v1115 = vrot.slane %v1026, 7
        %v1116 = vrot.slane %v1039, 6
        %v1117 = vrot.slane %v1052, 5
        %v1118 = vrot.slane %v1065, 4
        %v1119 = vrot.slane %v1078, 3
        %v1120 = vrot.slane %v1091, 2
        %v1121 = vrot.slane %v1104, 1
        %v1122 = vsel %vm935, %v1013, %v1115
        %v1123 = vsel %vm937, %v1116, %v1117
        %v1124 = vsel %vm939, %v1122, %v1123
        %v1125 = vsel %vm941, %v1118, %v1119
        %v1126 = vsel %vm943, %v1120, %v1121
        %v1127 = vsel %vm945, %v1125, %v1126
        %v1128 = vsel %vm729, %v1124, %v1127
        %v1130 = vadd.f32 %v949, %v1128
        %v1131 = vmax.f32 %v1130, 0.0
        %v1133 = vperm.slane %v1131, 0
        %v1134 = vperm.slane %v1131, 1
        %v1135 = vperm.slane %v1131, 2
        %v1136 = vperm.slane %v1131, 3
        %v1137 = vperm.slane %v1131, 4
        %v1138 = vperm.slane %v1131, 5
        %v1139 = vperm.slane %v1131, 6
        %v1140 = vperm.slane %v1131, 7
        %v1149 = vpack.c.bf16 %v1133, %v1133
        %v1150 = vpack.c.bf16 %v1134, %v1134
        %v1151 = vpack.c.bf16 %v1135, %v1135
        %v1152 = vpack.c.bf16 %v1136, %v1136
        %v1153 = vpack.c.bf16 %v1137, %v1137
        %v1154 = vpack.c.bf16 %v1138, %v1138
        %v1155 = vpack.c.bf16 %v1139, %v1139
        %v1156 = vpack.c.bf16 %v1140, %v1140
        %v1157 = vld [vmem:[#allocation11] sm:$0xff]
        %v1158 = vld [vmem:[#allocation11 + $0x8] sm:$0xff]
        %v1159 = vld [vmem:[#allocation11 + $0x10] sm:$0xff]
        %v1160 = vld [vmem:[#allocation11 + $0x18] sm:$0xff]
        %v1161 = vld [vmem:[#allocation11 + $0x20] sm:$0xff]
        %v1162 = vld [vmem:[#allocation11 + $0x28] sm:$0xff]
        %v1163 = vld [vmem:[#allocation11 + $0x30] sm:$0xff]
        %v1164 = vld [vmem:[#allocation11 + $0x38] sm:$0xff]
        %v1165 = vld [vmem:[#allocation11 + $0x40] sm:$0xff]
        %v1166 = vld [vmem:[#allocation11 + $0x48] sm:$0xff]
        %v1167 = vld [vmem:[#allocation11 + $0x50] sm:$0xff]
        %v1168 = vld [vmem:[#allocation11 + $0x58] sm:$0xff]
        %v1169 = vld [vmem:[#allocation11 + $0x60] sm:$0xff]
        %v1170 = vld [vmem:[#allocation11 + $0x68] sm:$0xff]
        %v1171 = vld [vmem:[#allocation11 + $0x70] sm:$0xff]
        %v1172 = vld [vmem:[#allocation11 + $0x78] sm:$0xff]
        %v1173 = vld [vmem:[#allocation11 + $0x80] sm:$0xff]
        %v1174 = vld [vmem:[#allocation11 + $0x88] sm:$0xff]
        %v1175 = vld [vmem:[#allocation11 + $0x90] sm:$0xff]
        %v1176 = vld [vmem:[#allocation11 + $0x98] sm:$0xff]
        %v1177 = vld [vmem:[#allocation11 + $0xa0] sm:$0xff]
        %v1178 = vld [vmem:[#allocation11 + $0xa8] sm:$0xff]
        %v1179 = vld [vmem:[#allocation11 + $0xb0] sm:$0xff]
        %v1180 = vld [vmem:[#allocation11 + $0xb8] sm:$0xff]
        %v1181 = vld [vmem:[#allocation11 + $0xc0] sm:$0xff]
        %v1182 = vld [vmem:[#allocation11 + $0xc8] sm:$0xff]
        %v1183 = vld [vmem:[#allocation11 + $0xd0] sm:$0xff]
        %v1184 = vld [vmem:[#allocation11 + $0xd8] sm:$0xff]
        %v1185 = vld [vmem:[#allocation11 + $0xe0] sm:$0xff]
        %v1186 = vld [vmem:[#allocation11 + $0xe8] sm:$0xff]
        %v1187 = vld [vmem:[#allocation11 + $0xf0] sm:$0xff]
        %v1188 = vld [vmem:[#allocation11 + $0xf8] sm:$0xff]
        %v1189 = vld [vmem:[#allocation11 + $0x100] sm:$0xff]
        %v1190 = vld [vmem:[#allocation11 + $0x108] sm:$0xff]
        %v1191 = vld [vmem:[#allocation11 + $0x110] sm:$0xff]
        %v1192 = vld [vmem:[#allocation11 + $0x118] sm:$0xff]
        %v1193 = vld [vmem:[#allocation11 + $0x120] sm:$0xff]
        %v1194 = vld [vmem:[#allocation11 + $0x128] sm:$0xff]
        %v1195 = vld [vmem:[#allocation11 + $0x130] sm:$0xff]
        %v1196 = vld [vmem:[#allocation11 + $0x138] sm:$0xff]
        %v1197 = vld [vmem:[#allocation11 + $0x140] sm:$0xff]
        %v1198 = vld [vmem:[#allocation11 + $0x148] sm:$0xff]
        %v1199 = vld [vmem:[#allocation11 + $0x150] sm:$0xff]
        %v1200 = vld [vmem:[#allocation11 + $0x158] sm:$0xff]
        %v1201 = vld [vmem:[#allocation11 + $0x160] sm:$0xff]
        %v1202 = vld [vmem:[#allocation11 + $0x168] sm:$0xff]
        %v1203 = vld [vmem:[#allocation11 + $0x170] sm:$0xff]
        %v1204 = vld [vmem:[#allocation11 + $0x178] sm:$0xff]
        %v1205 = vld [vmem:[#allocation11 + $0x180] sm:$0xff]
        %v1206 = vld [vmem:[#allocation11 + $0x188] sm:$0xff]
        %v1207 = vld [vmem:[#allocation11 + $0x190] sm:$0xff]
        %v1208 = vld [vmem:[#allocation11 + $0x198] sm:$0xff]
        %v1209 = vld [vmem:[#allocation11 + $0x1a0] sm:$0xff]
        %v1210 = vld [vmem:[#allocation11 + $0x1a8] sm:$0xff]
        %v1211 = vld [vmem:[#allocation11 + $0x1b0] sm:$0xff]
        %v1212 = vld [vmem:[#allocation11 + $0x1b8] sm:$0xff]
        %v1213 = vld [vmem:[#allocation11 + $0x1c0] sm:$0xff]
        %v1214 = vld [vmem:[#allocation11 + $0x1c8] sm:$0xff]
        %v1215 = vld [vmem:[#allocation11 + $0x1d0] sm:$0xff]
        %v1216 = vld [vmem:[#allocation11 + $0x1d8] sm:$0xff]
        %v1217 = vld [vmem:[#allocation11 + $0x1e0] sm:$0xff]
        %v1218 = vld [vmem:[#allocation11 + $0x1e8] sm:$0xff]
        %v1219 = vld [vmem:[#allocation11 + $0x1f0] sm:$0xff]
        %v1220 = vld [vmem:[#allocation11 + $0x1f8] sm:$0xff]
        %v1221 = vld [vmem:[#allocation11 + $0x200] sm:$0xff]
        %v1222 = vld [vmem:[#allocation11 + $0x208] sm:$0xff]
        %v1223 = vld [vmem:[#allocation11 + $0x210] sm:$0xff]
        %v1224 = vld [vmem:[#allocation11 + $0x218] sm:$0xff]
        %v1225 = vld [vmem:[#allocation11 + $0x220] sm:$0xff]
        %v1226 = vld [vmem:[#allocation11 + $0x228] sm:$0xff]
        %v1227 = vld [vmem:[#allocation11 + $0x230] sm:$0xff]
        %v1228 = vld [vmem:[#allocation11 + $0x238] sm:$0xff]
        %v1229 = vld [vmem:[#allocation11 + $0x240] sm:$0xff]
        %v1230 = vld [vmem:[#allocation11 + $0x248] sm:$0xff]
        %v1231 = vld [vmem:[#allocation11 + $0x250] sm:$0xff]
        %v1232 = vld [vmem:[#allocation11 + $0x258] sm:$0xff]
        %v1233 = vld [vmem:[#allocation11 + $0x260] sm:$0xff]
        %v1234 = vld [vmem:[#allocation11 + $0x268] sm:$0xff]
        %v1235 = vld [vmem:[#allocation11 + $0x270] sm:$0xff]
        %v1236 = vld [vmem:[#allocation11 + $0x278] sm:$0xff]
        %v1237 = vld [vmem:[#allocation11 + $0x280] sm:$0xff]
        %v1238 = vld [vmem:[#allocation11 + $0x288] sm:$0xff]
        %v1239 = vld [vmem:[#allocation11 + $0x290] sm:$0xff]
        %v1240 = vld [vmem:[#allocation11 + $0x298] sm:$0xff]
        %v1241 = vld [vmem:[#allocation11 + $0x2a0] sm:$0xff]
        %v1242 = vld [vmem:[#allocation11 + $0x2a8] sm:$0xff]
        %v1243 = vld [vmem:[#allocation11 + $0x2b0] sm:$0xff]
        %v1244 = vld [vmem:[#allocation11 + $0x2b8] sm:$0xff]
        %v1245 = vld [vmem:[#allocation11 + $0x2c0] sm:$0xff]
        %v1246 = vld [vmem:[#allocation11 + $0x2c8] sm:$0xff]
        %v1247 = vld [vmem:[#allocation11 + $0x2d0] sm:$0xff]
        %v1248 = vld [vmem:[#allocation11 + $0x2d8] sm:$0xff]
        %v1249 = vld [vmem:[#allocation11 + $0x2e0] sm:$0xff]
        %v1250 = vld [vmem:[#allocation11 + $0x2e8] sm:$0xff]
        %v1251 = vld [vmem:[#allocation11 + $0x2f0] sm:$0xff]
        %v1252 = vld [vmem:[#allocation11 + $0x2f8] sm:$0xff]
        %v1253 = vld [vmem:[#allocation11 + $0x300] sm:$0xff]
        %v1254 = vld [vmem:[#allocation11 + $0x308] sm:$0xff]
        %v1255 = vld [vmem:[#allocation11 + $0x310] sm:$0xff]
        %v1256 = vld [vmem:[#allocation11 + $0x318] sm:$0xff]
        %v1257 = vld [vmem:[#allocation11 + $0x320] sm:$0xff]
        %v1258 = vld [vmem:[#allocation11 + $0x328] sm:$0xff]
        %v1259 = vld [vmem:[#allocation11 + $0x330] sm:$0xff]
        %v1260 = vld [vmem:[#allocation11 + $0x338] sm:$0xff]
        %v1261 = vld [vmem:[#allocation11 + $0x340] sm:$0xff]
        %v1262 = vld [vmem:[#allocation11 + $0x348] sm:$0xff]
        %v1263 = vld [vmem:[#allocation11 + $0x350] sm:$0xff]
        %v1264 = vld [vmem:[#allocation11 + $0x358] sm:$0xff]
        %v1265 = vld [vmem:[#allocation11 + $0x360] sm:$0xff]
        %v1266 = vld [vmem:[#allocation11 + $0x368] sm:$0xff]
        %v1267 = vld [vmem:[#allocation11 + $0x370] sm:$0xff]
        %v1268 = vld [vmem:[#allocation11 + $0x378] sm:$0xff]
        %v1269 = vld [vmem:[#allocation11 + $0x380] sm:$0xff]
        %v1270 = vld [vmem:[#allocation11 + $0x388] sm:$0xff]
        %v1271 = vld [vmem:[#allocation11 + $0x390] sm:$0xff]
        %v1272 = vld [vmem:[#allocation11 + $0x398] sm:$0xff]
        %v1273 = vld [vmem:[#allocation11 + $0x3a0] sm:$0xff]
        %v1274 = vld [vmem:[#allocation11 + $0x3a8] sm:$0xff]
        %v1275 = vld [vmem:[#allocation11 + $0x3b0] sm:$0xff]
        %v1276 = vld [vmem:[#allocation11 + $0x3b8] sm:$0xff]
        %v1277 = vld [vmem:[#allocation11 + $0x3c0] sm:$0xff]
        %v1278 = vld [vmem:[#allocation11 + $0x3c8] sm:$0xff]
        %v1279 = vld [vmem:[#allocation11 + $0x3d0] sm:$0xff]
        %v1280 = vld [vmem:[#allocation11 + $0x3d8] sm:$0xff]
        %v1281 = vld [vmem:[#allocation11 + $0x3e0] sm:$0xff]
        %v1282 = vld [vmem:[#allocation11 + $0x3e8] sm:$0xff]
        %v1283 = vld [vmem:[#allocation11 + $0x3f0] sm:$0xff]
        %v1284 = vld [vmem:[#allocation11 + $0x3f8] sm:$0xff]
        %v1285 = vld [vmem:[%s13] sm:$0x3]
        %v1414 = vunpack.c.l.b16 %v1157
        %v1415 = vunpack.c.h.b16 %v1157
        %v1416 = vunpack.c.l.b16 %v1158
        %v1417 = vunpack.c.h.b16 %v1158
        %v1418 = vunpack.c.l.b16 %v1159
        %v1419 = vunpack.c.h.b16 %v1159
        %v1420 = vunpack.c.l.b16 %v1160
        %v1421 = vunpack.c.h.b16 %v1160
        %v1422 = vunpack.c.l.b16 %v1161
        %v1423 = vunpack.c.h.b16 %v1161
        %v1424 = vunpack.c.l.b16 %v1162
        %v1425 = vunpack.c.h.b16 %v1162
        %v1426 = vunpack.c.l.b16 %v1163
        %v1427 = vunpack.c.h.b16 %v1163
        %v1428 = vunpack.c.l.b16 %v1164
        %v1429 = vunpack.c.h.b16 %v1164
        %v1430 = vunpack.c.l.b16 %v1165
        %v1431 = vunpack.c.h.b16 %v1165
        %v1432 = vunpack.c.l.b16 %v1166
        %v1433 = vunpack.c.h.b16 %v1166
        %v1434 = vunpack.c.l.b16 %v1167
        %v1435 = vunpack.c.h.b16 %v1167
        %v1436 = vunpack.c.l.b16 %v1168
        %v1437 = vunpack.c.h.b16 %v1168
        %v1438 = vunpack.c.l.b16 %v1169
        %v1439 = vunpack.c.h.b16 %v1169
        %v1440 = vunpack.c.l.b16 %v1170
        %v1441 = vunpack.c.h.b16 %v1170
        %v1442 = vunpack.c.l.b16 %v1171
        %v1443 = vunpack.c.h.b16 %v1171
        %v1444 = vunpack.c.l.b16 %v1172
        %v1445 = vunpack.c.h.b16 %v1172
        %v1446 = vunpack.c.l.b16 %v1173
        %v1447 = vunpack.c.h.b16 %v1173
        %v1448 = vunpack.c.l.b16 %v1174
        %v1449 = vunpack.c.h.b16 %v1174
        %v1450 = vunpack.c.l.b16 %v1175
        %v1451 = vunpack.c.h.b16 %v1175
        %v1452 = vunpack.c.l.b16 %v1176
        %v1453 = vunpack.c.h.b16 %v1176
        %v1454 = vunpack.c.l.b16 %v1177
        %v1455 = vunpack.c.h.b16 %v1177
        %v1456 = vunpack.c.l.b16 %v1178
        %v1457 = vunpack.c.h.b16 %v1178
        %v1458 = vunpack.c.l.b16 %v1179
        %v1459 = vunpack.c.h.b16 %v1179
        %v1460 = vunpack.c.l.b16 %v1180
        %v1461 = vunpack.c.h.b16 %v1180
        %v1462 = vunpack.c.l.b16 %v1181
        %v1463 = vunpack.c.h.b16 %v1181
        %v1464 = vunpack.c.l.b16 %v1182
        %v1465 = vunpack.c.h.b16 %v1182
        %v1466 = vunpack.c.l.b16 %v1183
        %v1467 = vunpack.c.h.b16 %v1183
        %v1468 = vunpack.c.l.b16 %v1184
        %v1469 = vunpack.c.h.b16 %v1184
        %v1470 = vunpack.c.l.b16 %v1185
        %v1471 = vunpack.c.h.b16 %v1185
        %v1472 = vunpack.c.l.b16 %v1186
        %v1473 = vunpack.c.h.b16 %v1186
        %v1474 = vunpack.c.l.b16 %v1187
        %v1475 = vunpack.c.h.b16 %v1187
        %v1476 = vunpack.c.l.b16 %v1188
        %v1477 = vunpack.c.h.b16 %v1188
        %v1478 = vunpack.c.l.b16 %v1189
        %v1479 = vunpack.c.h.b16 %v1189
        %v1480 = vunpack.c.l.b16 %v1190
        %v1481 = vunpack.c.h.b16 %v1190
        %v1482 = vunpack.c.l.b16 %v1191
        %v1483 = vunpack.c.h.b16 %v1191
        %v1484 = vunpack.c.l.b16 %v1192
        %v1485 = vunpack.c.h.b16 %v1192
        %v1486 = vunpack.c.l.b16 %v1193
        %v1487 = vunpack.c.h.b16 %v1193
        %v1488 = vunpack.c.l.b16 %v1194
        %v1489 = vunpack.c.h.b16 %v1194
        %v1490 = vunpack.c.l.b16 %v1195
        %v1491 = vunpack.c.h.b16 %v1195
        %v1492 = vunpack.c.l.b16 %v1196
        %v1493 = vunpack.c.h.b16 %v1196
        %v1494 = vunpack.c.l.b16 %v1197
        %v1495 = vunpack.c.h.b16 %v1197
        %v1496 = vunpack.c.l.b16 %v1198
        %v1497 = vunpack.c.h.b16 %v1198
        %v1498 = vunpack.c.l.b16 %v1199
        %v1499 = vunpack.c.h.b16 %v1199
        %v1500 = vunpack.c.l.b16 %v1200
        %v1501 = vunpack.c.h.b16 %v1200
        %v1502 = vunpack.c.l.b16 %v1201
        %v1503 = vunpack.c.h.b16 %v1201
        %v1504 = vunpack.c.l.b16 %v1202
        %v1505 = vunpack.c.h.b16 %v1202
        %v1506 = vunpack.c.l.b16 %v1203
        %v1507 = vunpack.c.h.b16 %v1203
        %v1508 = vunpack.c.l.b16 %v1204
        %v1509 = vunpack.c.h.b16 %v1204
        %v1510 = vunpack.c.l.b16 %v1205
        %v1511 = vunpack.c.h.b16 %v1205
        %v1512 = vunpack.c.l.b16 %v1206
        %v1513 = vunpack.c.h.b16 %v1206
        %v1514 = vunpack.c.l.b16 %v1207
        %v1515 = vunpack.c.h.b16 %v1207
        %v1516 = vunpack.c.l.b16 %v1208
        %v1517 = vunpack.c.h.b16 %v1208
        %v1518 = vunpack.c.l.b16 %v1209
        %v1519 = vunpack.c.h.b16 %v1209
        %v1520 = vunpack.c.l.b16 %v1210
        %v1521 = vunpack.c.h.b16 %v1210
        %v1522 = vunpack.c.l.b16 %v1211
        %v1523 = vunpack.c.h.b16 %v1211
        %v1524 = vunpack.c.l.b16 %v1212
        %v1525 = vunpack.c.h.b16 %v1212
        %v1526 = vunpack.c.l.b16 %v1213
        %v1527 = vunpack.c.h.b16 %v1213
        %v1528 = vunpack.c.l.b16 %v1214
        %v1529 = vunpack.c.h.b16 %v1214
        %v1530 = vunpack.c.l.b16 %v1215
        %v1531 = vunpack.c.h.b16 %v1215
        %v1532 = vunpack.c.l.b16 %v1216
        %v1533 = vunpack.c.h.b16 %v1216
        %v1534 = vunpack.c.l.b16 %v1217
        %v1535 = vunpack.c.h.b16 %v1217
        %v1536 = vunpack.c.l.b16 %v1218
        %v1537 = vunpack.c.h.b16 %v1218
        %v1538 = vunpack.c.l.b16 %v1219
        %v1539 = vunpack.c.h.b16 %v1219
        %v1540 = vunpack.c.l.b16 %v1220
        %v1541 = vunpack.c.h.b16 %v1220
        %v1542 = vunpack.c.l.b16 %v1221
        %v1543 = vunpack.c.h.b16 %v1221
        %v1544 = vunpack.c.l.b16 %v1222
        %v1545 = vunpack.c.h.b16 %v1222
        %v1546 = vunpack.c.l.b16 %v1223
        %v1547 = vunpack.c.h.b16 %v1223
        %v1548 = vunpack.c.l.b16 %v1224
        %v1549 = vunpack.c.h.b16 %v1224
        %v1550 = vunpack.c.l.b16 %v1225
        %v1551 = vunpack.c.h.b16 %v1225
        %v1552 = vunpack.c.l.b16 %v1226
        %v1553 = vunpack.c.h.b16 %v1226
        %v1554 = vunpack.c.l.b16 %v1227
        %v1555 = vunpack.c.h.b16 %v1227
        %v1556 = vunpack.c.l.b16 %v1228
        %v1557 = vunpack.c.h.b16 %v1228
        %v1558 = vunpack.c.l.b16 %v1229
        %v1559 = vunpack.c.h.b16 %v1229
        %v1560 = vunpack.c.l.b16 %v1230
        %v1561 = vunpack.c.h.b16 %v1230
        %v1562 = vunpack.c.l.b16 %v1231
        %v1563 = vunpack.c.h.b16 %v1231
        %v1564 = vunpack.c.l.b16 %v1232
        %v1565 = vunpack.c.h.b16 %v1232
        %v1566 = vunpack.c.l.b16 %v1233
        %v1567 = vunpack.c.h.b16 %v1233
        %v1568 = vunpack.c.l.b16 %v1234
        %v1569 = vunpack.c.h.b16 %v1234
        %v1570 = vunpack.c.l.b16 %v1235
        %v1571 = vunpack.c.h.b16 %v1235
        %v1572 = vunpack.c.l.b16 %v1236
        %v1573 = vunpack.c.h.b16 %v1236
        %v1574 = vunpack.c.l.b16 %v1237
        %v1575 = vunpack.c.h.b16 %v1237
        %v1576 = vunpack.c.l.b16 %v1238
        %v1577 = vunpack.c.h.b16 %v1238
        %v1578 = vunpack.c.l.b16 %v1239
        %v1579 = vunpack.c.h.b16 %v1239
        %v1580 = vunpack.c.l.b16 %v1240
        %v1581 = vunpack.c.h.b16 %v1240
        %v1582 = vunpack.c.l.b16 %v1241
        %v1583 = vunpack.c.h.b16 %v1241
        %v1584 = vunpack.c.l.b16 %v1242
        %v1585 = vunpack.c.h.b16 %v1242
        %v1586 = vunpack.c.l.b16 %v1243
        %v1587 = vunpack.c.h.b16 %v1243
        %v1588 = vunpack.c.l.b16 %v1244
        %v1589 = vunpack.c.h.b16 %v1244
        %v1590 = vunpack.c.l.b16 %v1245
        %v1591 = vunpack.c.h.b16 %v1245
        %v1592 = vunpack.c.l.b16 %v1246
        %v1593 = vunpack.c.h.b16 %v1246
        %v1594 = vunpack.c.l.b16 %v1247
        %v1595 = vunpack.c.h.b16 %v1247
        %v1596 = vunpack.c.l.b16 %v1248
        %v1597 = vunpack.c.h.b16 %v1248
        %v1598 = vunpack.c.l.b16 %v1249
        %v1599 = vunpack.c.h.b16 %v1249
        %v1600 = vunpack.c.l.b16 %v1250
        %v1601 = vunpack.c.h.b16 %v1250
        %v1602 = vunpack.c.l.b16 %v1251
        %v1603 = vunpack.c.h.b16 %v1251
        %v1604 = vunpack.c.l.b16 %v1252
        %v1605 = vunpack.c.h.b16 %v1252
        %v1606 = vunpack.c.l.b16 %v1253
        %v1607 = vunpack.c.h.b16 %v1253
        %v1608 = vunpack.c.l.b16 %v1254
        %v1609 = vunpack.c.h.b16 %v1254
        %v1610 = vunpack.c.l.b16 %v1255
        %v1611 = vunpack.c.h.b16 %v1255
        %v1612 = vunpack.c.l.b16 %v1256
        %v1613 = vunpack.c.h.b16 %v1256
        %v1614 = vunpack.c.l.b16 %v1257
        %v1615 = vunpack.c.h.b16 %v1257
        %v1616 = vunpack.c.l.b16 %v1258
        %v1617 = vunpack.c.h.b16 %v1258
        %v1618 = vunpack.c.l.b16 %v1259
        %v1619 = vunpack.c.h.b16 %v1259
        %v1620 = vunpack.c.l.b16 %v1260
        %v1621 = vunpack.c.h.b16 %v1260
        %v1622 = vunpack.c.l.b16 %v1261
        %v1623 = vunpack.c.h.b16 %v1261
        %v1624 = vunpack.c.l.b16 %v1262
        %v1625 = vunpack.c.h.b16 %v1262
        %v1626 = vunpack.c.l.b16 %v1263
        %v1627 = vunpack.c.h.b16 %v1263
        %v1628 = vunpack.c.l.b16 %v1264
        %v1629 = vunpack.c.h.b16 %v1264
        %v1630 = vunpack.c.l.b16 %v1265
        %v1631 = vunpack.c.h.b16 %v1265
        %v1632 = vunpack.c.l.b16 %v1266
        %v1633 = vunpack.c.h.b16 %v1266
        %v1634 = vunpack.c.l.b16 %v1267
        %v1635 = vunpack.c.h.b16 %v1267
        %v1636 = vunpack.c.l.b16 %v1268
        %v1637 = vunpack.c.h.b16 %v1268
        %v1638 = vunpack.c.l.b16 %v1269
        %v1639 = vunpack.c.h.b16 %v1269
        %v1640 = vunpack.c.l.b16 %v1270
        %v1641 = vunpack.c.h.b16 %v1270
        %v1642 = vunpack.c.l.b16 %v1271
        %v1643 = vunpack.c.h.b16 %v1271
        %v1644 = vunpack.c.l.b16 %v1272
        %v1645 = vunpack.c.h.b16 %v1272
        %v1646 = vunpack.c.l.b16 %v1273
        %v1647 = vunpack.c.h.b16 %v1273
        %v1648 = vunpack.c.l.b16 %v1274
        %v1649 = vunpack.c.h.b16 %v1274
        %v1650 = vunpack.c.l.b16 %v1275
        %v1651 = vunpack.c.h.b16 %v1275
        %v1652 = vunpack.c.l.b16 %v1276
        %v1653 = vunpack.c.h.b16 %v1276
        %v1654 = vunpack.c.l.b16 %v1277
        %v1655 = vunpack.c.h.b16 %v1277
        %v1656 = vunpack.c.l.b16 %v1278
        %v1657 = vunpack.c.h.b16 %v1278
        %v1658 = vunpack.c.l.b16 %v1279
        %v1659 = vunpack.c.h.b16 %v1279
        %v1660 = vunpack.c.l.b16 %v1280
        %v1661 = vunpack.c.h.b16 %v1280
        %v1662 = vunpack.c.l.b16 %v1281
        %v1663 = vunpack.c.h.b16 %v1281
        %v1664 = vunpack.c.l.b16 %v1282
        %v1665 = vunpack.c.h.b16 %v1282
        %v1666 = vunpack.c.l.b16 %v1283
        %v1667 = vunpack.c.h.b16 %v1283
        %v1668 = vunpack.c.l.b16 %v1284
        %v1669 = vunpack.c.h.b16 %v1284
        %v1670 = vpack.c.b16 %v1416, %v1414
        %v1671 = vpack.c.b16 %v1417, %v1415
        %v1672 = vpack.c.b16 %v1420, %v1418
        %v1673 = vpack.c.b16 %v1421, %v1419
        %v1674 = vpack.c.b16 %v1424, %v1422
        %v1675 = vpack.c.b16 %v1425, %v1423
        %v1676 = vpack.c.b16 %v1428, %v1426
        %v1677 = vpack.c.b16 %v1429, %v1427
        %v1678 = vpack.c.b16 %v1432, %v1430
        %v1679 = vpack.c.b16 %v1433, %v1431
        %v1680 = vpack.c.b16 %v1436, %v1434
        %v1681 = vpack.c.b16 %v1437, %v1435
        %v1682 = vpack.c.b16 %v1440, %v1438
        %v1683 = vpack.c.b16 %v1441, %v1439
        %v1684 = vpack.c.b16 %v1444, %v1442
        %v1685 = vpack.c.b16 %v1445, %v1443
        %v1686 = vpack.c.b16 %v1448, %v1446
        %v1687 = vpack.c.b16 %v1449, %v1447
        %v1688 = vpack.c.b16 %v1452, %v1450
        %v1689 = vpack.c.b16 %v1453, %v1451
        %v1690 = vpack.c.b16 %v1456, %v1454
        %v1691 = vpack.c.b16 %v1457, %v1455
        %v1692 = vpack.c.b16 %v1460, %v1458
        %v1693 = vpack.c.b16 %v1461, %v1459
        %v1694 = vpack.c.b16 %v1464, %v1462
        %v1695 = vpack.c.b16 %v1465, %v1463
        %v1696 = vpack.c.b16 %v1468, %v1466
        %v1697 = vpack.c.b16 %v1469, %v1467
        %v1698 = vpack.c.b16 %v1472, %v1470
        %v1699 = vpack.c.b16 %v1473, %v1471
        %v1700 = vpack.c.b16 %v1476, %v1474
        %v1701 = vpack.c.b16 %v1477, %v1475
        %v1702 = vpack.c.b16 %v1480, %v1478
        %v1703 = vpack.c.b16 %v1481, %v1479
        %v1704 = vpack.c.b16 %v1484, %v1482
        %v1705 = vpack.c.b16 %v1485, %v1483
        %v1706 = vpack.c.b16 %v1488, %v1486
        %v1707 = vpack.c.b16 %v1489, %v1487
        %v1708 = vpack.c.b16 %v1492, %v1490
        %v1709 = vpack.c.b16 %v1493, %v1491
        %v1710 = vpack.c.b16 %v1496, %v1494
        %v1711 = vpack.c.b16 %v1497, %v1495
        %v1712 = vpack.c.b16 %v1500, %v1498
        %v1713 = vpack.c.b16 %v1501, %v1499
        %v1714 = vpack.c.b16 %v1504, %v1502
        %v1715 = vpack.c.b16 %v1505, %v1503
        %v1716 = vpack.c.b16 %v1508, %v1506
        %v1717 = vpack.c.b16 %v1509, %v1507
        %v1718 = vpack.c.b16 %v1512, %v1510
        %v1719 = vpack.c.b16 %v1513, %v1511
        %v1720 = vpack.c.b16 %v1516, %v1514
        %v1721 = vpack.c.b16 %v1517, %v1515
        %v1722 = vpack.c.b16 %v1520, %v1518
        %v1723 = vpack.c.b16 %v1521, %v1519
        %v1724 = vpack.c.b16 %v1524, %v1522
        %v1725 = vpack.c.b16 %v1525, %v1523
        %v1726 = vpack.c.b16 %v1528, %v1526
        %v1727 = vpack.c.b16 %v1529, %v1527
        %v1728 = vpack.c.b16 %v1532, %v1530
        %v1729 = vpack.c.b16 %v1533, %v1531
        %v1730 = vpack.c.b16 %v1536, %v1534
        %v1731 = vpack.c.b16 %v1537, %v1535
        %v1732 = vpack.c.b16 %v1540, %v1538
        %v1733 = vpack.c.b16 %v1541, %v1539
        %v1734 = vpack.c.b16 %v1544, %v1542
        %v1735 = vpack.c.b16 %v1545, %v1543
        %v1736 = vpack.c.b16 %v1548, %v1546
        %v1737 = vpack.c.b16 %v1549, %v1547
        %v1738 = vpack.c.b16 %v1552, %v1550
        %v1739 = vpack.c.b16 %v1553, %v1551
        %v1740 = vpack.c.b16 %v1556, %v1554
        %v1741 = vpack.c.b16 %v1557, %v1555
        %v1742 = vpack.c.b16 %v1560, %v1558
        %v1743 = vpack.c.b16 %v1561, %v1559
        %v1744 = vpack.c.b16 %v1564, %v1562
        %v1745 = vpack.c.b16 %v1565, %v1563
        %v1746 = vpack.c.b16 %v1568, %v1566
        %v1747 = vpack.c.b16 %v1569, %v1567
        %v1748 = vpack.c.b16 %v1572, %v1570
        %v1749 = vpack.c.b16 %v1573, %v1571
        %v1750 = vpack.c.b16 %v1576, %v1574
        %v1751 = vpack.c.b16 %v1577, %v1575
        %v1752 = vpack.c.b16 %v1580, %v1578
        %v1753 = vpack.c.b16 %v1581, %v1579
        %v1754 = vpack.c.b16 %v1584, %v1582
        %v1755 = vpack.c.b16 %v1585, %v1583
        %v1756 = vpack.c.b16 %v1588, %v1586
        %v1757 = vpack.c.b16 %v1589, %v1587
        %v1758 = vpack.c.b16 %v1592, %v1590
        %v1759 = vpack.c.b16 %v1593, %v1591
        %v1760 = vpack.c.b16 %v1596, %v1594
        %v1761 = vpack.c.b16 %v1597, %v1595
        %v1762 = vpack.c.b16 %v1600, %v1598
        %v1763 = vpack.c.b16 %v1601, %v1599
        %v1764 = vpack.c.b16 %v1604, %v1602
        %v1765 = vpack.c.b16 %v1605, %v1603
        %v1766 = vpack.c.b16 %v1608, %v1606
        %v1767 = vpack.c.b16 %v1609, %v1607
        %v1768 = vpack.c.b16 %v1612, %v1610
        %v1769 = vpack.c.b16 %v1613, %v1611
        %v1770 = vpack.c.b16 %v1616, %v1614
        %v1771 = vpack.c.b16 %v1617, %v1615
        %v1772 = vpack.c.b16 %v1620, %v1618
        %v1773 = vpack.c.b16 %v1621, %v1619
        %v1774 = vpack.c.b16 %v1624, %v1622
        %v1775 = vpack.c.b16 %v1625, %v1623
        %v1776 = vpack.c.b16 %v1628, %v1626
        %v1777 = vpack.c.b16 %v1629, %v1627
        %v1778 = vpack.c.b16 %v1632, %v1630
        %v1779 = vpack.c.b16 %v1633, %v1631
        %v1780 = vpack.c.b16 %v1636, %v1634
        %v1781 = vpack.c.b16 %v1637, %v1635
        %v1782 = vpack.c.b16 %v1640, %v1638
        %v1783 = vpack.c.b16 %v1641, %v1639
        %v1784 = vpack.c.b16 %v1644, %v1642
        %v1785 = vpack.c.b16 %v1645, %v1643
        %v1786 = vpack.c.b16 %v1648, %v1646
        %v1787 = vpack.c.b16 %v1649, %v1647
        %v1788 = vpack.c.b16 %v1652, %v1650
        %v1789 = vpack.c.b16 %v1653, %v1651
        %v1790 = vpack.c.b16 %v1656, %v1654
        %v1791 = vpack.c.b16 %v1657, %v1655
        %v1792 = vpack.c.b16 %v1660, %v1658
        %v1793 = vpack.c.b16 %v1661, %v1659
        %v1794 = vpack.c.b16 %v1664, %v1662
        %v1795 = vpack.c.b16 %v1665, %v1663
        %v1796 = vpack.c.b16 %v1668, %v1666
        %v1797 = vpack.c.b16 %v1669, %v1667
        %v1927 = vperm.slane %v1285, 0
        %v1928 = vperm.slane %v1285, 1
        %1931 = vmatpush.bf16.msra.mxu0 %v1684
        %1932 = vmatpush.bf16.msra.mxu0 %v1682
        %1933 = vmatpush.bf16.msra.mxu0 %v1680
        %1934 = vmatpush.bf16.msra.mxu0 %v1678
        %1935 = vmatpush.bf16.msra.mxu0 %v1676
        %1936 = vmatpush.bf16.msra.mxu0 %v1674
        %1937 = vmatpush.bf16.msra.mxu0 %v1672
        %1938 = vmatpush.bf16.msra.mxu0 %v1670
        %1939 = vmatmul.bf16.gmra.mxu0 %v1149
        %v1940 = vpop.f32.mrf.mxu0
        %v1941 = vadd.f32 %v1927, %v1940
        %v1942 = vpop.f32.mrf.mxu0
        %1943 = vdwg.mxu0
        %1944 = vmatpush.bf16.msra.mxu0 %v1700
        %1945 = vmatpush.bf16.msra.mxu0 %v1698
        %1946 = vmatpush.bf16.msra.mxu0 %v1696
        %1947 = vmatpush.bf16.msra.mxu0 %v1694
        %1948 = vmatpush.bf16.msra.mxu0 %v1692
        %1949 = vmatpush.bf16.msra.mxu0 %v1690
        %1950 = vmatpush.bf16.msra.mxu0 %v1688
        %1951 = vmatpush.bf16.msra.mxu0 %v1686
        %1952 = vmatmul.bf16.gmra.mxu0 %v1150
        %v1953 = vpop.f32.mrf.mxu0
        %v1954 = vadd.f32 %v1941, %v1953
        %v1955 = vpop.f32.mrf.mxu0
        %1956 = vdwg.mxu0
        %1957 = vmatpush.bf16.msra.mxu0 %v1716
        %1958 = vmatpush.bf16.msra.mxu0 %v1714
        %1959 = vmatpush.bf16.msra.mxu0 %v1712
        %1960 = vmatpush.bf16.msra.mxu0 %v1710
        %1961 = vmatpush.bf16.msra.mxu0 %v1708
        %1962 = vmatpush.bf16.msra.mxu0 %v1706
        %1963 = vmatpush.bf16.msra.mxu0 %v1704
        %1964 = vmatpush.bf16.msra.mxu0 %v1702
        %1965 = vmatmul.bf16.gmra.mxu0 %v1151
        %v1966 = vpop.f32.mrf.mxu0
        %v1967 = vadd.f32 %v1954, %v1966
        %v1968 = vpop.f32.mrf.mxu0
        %1969 = vdwg.mxu0
        %1970 = vmatpush.bf16.msra.mxu0 %v1732
        %1971 = vmatpush.bf16.msra.mxu0 %v1730
        %1972 = vmatpush.bf16.msra.mxu0 %v1728
        %1973 = vmatpush.bf16.msra.mxu0 %v1726
        %1974 = vmatpush.bf16.msra.mxu0 %v1724
        %1975 = vmatpush.bf16.msra.mxu0 %v1722
        %1976 = vmatpush.bf16.msra.mxu0 %v1720
        %1977 = vmatpush.bf16.msra.mxu0 %v1718
        %1978 = vmatmul.bf16.gmra.mxu0 %v1152
        %v1979 = vpop.f32.mrf.mxu0
        %v1980 = vadd.f32 %v1967, %v1979
        %v1981 = vpop.f32.mrf.mxu0
        %1982 = vdwg.mxu0
        %1983 = vmatpush.bf16.msra.mxu0 %v1748
        %1984 = vmatpush.bf16.msra.mxu0 %v1746
        %1985 = vmatpush.bf16.msra.mxu0 %v1744
        %1986 = vmatpush.bf16.msra.mxu0 %v1742
        %1987 = vmatpush.bf16.msra.mxu0 %v1740
        %1988 = vmatpush.bf16.msra.mxu0 %v1738
        %1989 = vmatpush.bf16.msra.mxu0 %v1736
        %1990 = vmatpush.bf16.msra.mxu0 %v1734
        %1991 = vmatmul.bf16.gmra.mxu0 %v1153
        %v1992 = vpop.f32.mrf.mxu0
        %v1993 = vadd.f32 %v1980, %v1992
        %v1994 = vpop.f32.mrf.mxu0
        %1995 = vdwg.mxu0
        %1996 = vmatpush.bf16.msra.mxu0 %v1764
        %1997 = vmatpush.bf16.msra.mxu0 %v1762
        %1998 = vmatpush.bf16.msra.mxu0 %v1760
        %1999 = vmatpush.bf16.msra.mxu0 %v1758
        %2000 = vmatpush.bf16.msra.mxu0 %v1756
        %2001 = vmatpush.bf16.msra.mxu0 %v1754
        %2002 = vmatpush.bf16.msra.mxu0 %v1752
        %2003 = vmatpush.bf16.msra.mxu0 %v1750
        %2004 = vmatmul.bf16.gmra.mxu0 %v1154
        %v2005 = vpop.f32.mrf.mxu0
        %v2006 = vadd.f32 %v1993, %v2005
        %v2007 = vpop.f32.mrf.mxu0
        %2008 = vdwg.mxu0
        %2009 = vmatpush.bf16.msra.mxu0 %v1780
        %2010 = vmatpush.bf16.msra.mxu0 %v1778
        %2011 = vmatpush.bf16.msra.mxu0 %v1776
        %2012 = vmatpush.bf16.msra.mxu0 %v1774
        %2013 = vmatpush.bf16.msra.mxu0 %v1772
        %2014 = vmatpush.bf16.msra.mxu0 %v1770
        %2015 = vmatpush.bf16.msra.mxu0 %v1768
        %2016 = vmatpush.bf16.msra.mxu0 %v1766
        %2017 = vmatmul.bf16.gmra.mxu0 %v1155
        %v2018 = vpop.f32.mrf.mxu0
        %v2019 = vadd.f32 %v2006, %v2018
        %v2020 = vpop.f32.mrf.mxu0
        %2021 = vdwg.mxu0
        %2022 = vmatpush.bf16.msra.mxu0 %v1796
        %2023 = vmatpush.bf16.msra.mxu0 %v1794
        %2024 = vmatpush.bf16.msra.mxu0 %v1792
        %2025 = vmatpush.bf16.msra.mxu0 %v1790
        %2026 = vmatpush.bf16.msra.mxu0 %v1788
        %2027 = vmatpush.bf16.msra.mxu0 %v1786
        %2028 = vmatpush.bf16.msra.mxu0 %v1784
        %2029 = vmatpush.bf16.msra.mxu0 %v1782
        %2030 = vmatmul.bf16.gmra.mxu0 %v1156
        %v2031 = vpop.f32.mrf.mxu0
        %v2032 = vadd.f32 %v2019, %v2031
        %v2033 = vpop.f32.mrf.mxu0
        %2034 = vdwg.mxu0
        %2035 = vmatpush.bf16.msra.mxu0 %v1685
        %2036 = vmatpush.bf16.msra.mxu0 %v1683
        %2037 = vmatpush.bf16.msra.mxu0 %v1681
        %2038 = vmatpush.bf16.msra.mxu0 %v1679
        %2039 = vmatpush.bf16.msra.mxu0 %v1677
        %2040 = vmatpush.bf16.msra.mxu0 %v1675
        %2041 = vmatpush.bf16.msra.mxu0 %v1673
        %2042 = vmatpush.bf16.msra.mxu0 %v1671
        %2043 = vmatmul.bf16.gmra.mxu0 %v1149
        %v2044 = vpop.f32.mrf.mxu0
        %v2045 = vadd.f32 %v1928, %v2044
        %v2046 = vpop.f32.mrf.mxu0
        %2047 = vdwg.mxu0
        %2048 = vmatpush.bf16.msra.mxu0 %v1701
        %2049 = vmatpush.bf16.msra.mxu0 %v1699
        %2050 = vmatpush.bf16.msra.mxu0 %v1697
        %2051 = vmatpush.bf16.msra.mxu0 %v1695
        %2052 = vmatpush.bf16.msra.mxu0 %v1693
        %2053 = vmatpush.bf16.msra.mxu0 %v1691
        %2054 = vmatpush.bf16.msra.mxu0 %v1689
        %2055 = vmatpush.bf16.msra.mxu0 %v1687
        %2056 = vmatmul.bf16.gmra.mxu0 %v1150
        %v2057 = vpop.f32.mrf.mxu0
        %v2058 = vadd.f32 %v2045, %v2057
        %v2059 = vpop.f32.mrf.mxu0
        %2060 = vdwg.mxu0
        %2061 = vmatpush.bf16.msra.mxu0 %v1717
        %2062 = vmatpush.bf16.msra.mxu0 %v1715
        %2063 = vmatpush.bf16.msra.mxu0 %v1713
        %2064 = vmatpush.bf16.msra.mxu0 %v1711
        %2065 = vmatpush.bf16.msra.mxu0 %v1709
        %2066 = vmatpush.bf16.msra.mxu0 %v1707
        %2067 = vmatpush.bf16.msra.mxu0 %v1705
        %2068 = vmatpush.bf16.msra.mxu0 %v1703
        %2069 = vmatmul.bf16.gmra.mxu0 %v1151
        %v2070 = vpop.f32.mrf.mxu0
        %v2071 = vadd.f32 %v2058, %v2070
        %v2072 = vpop.f32.mrf.mxu0
        %2073 = vdwg.mxu0
        %2074 = vmatpush.bf16.msra.mxu0 %v1733
        %2075 = vmatpush.bf16.msra.mxu0 %v1731
        %2076 = vmatpush.bf16.msra.mxu0 %v1729
        %2077 = vmatpush.bf16.msra.mxu0 %v1727
        %2078 = vmatpush.bf16.msra.mxu0 %v1725
        %2079 = vmatpush.bf16.msra.mxu0 %v1723
        %2080 = vmatpush.bf16.msra.mxu0 %v1721
        %2081 = vmatpush.bf16.msra.mxu0 %v1719
        %2082 = vmatmul.bf16.gmra.mxu0 %v1152
        %v2083 = vpop.f32.mrf.mxu0
        %v2084 = vadd.f32 %v2071, %v2083
        %v2085 = vpop.f32.mrf.mxu0
        %2086 = vdwg.mxu0
        %2087 = vmatpush.bf16.msra.mxu0 %v1749
        %2088 = vmatpush.bf16.msra.mxu0 %v1747
        %2089 = vmatpush.bf16.msra.mxu0 %v1745
        %2090 = vmatpush.bf16.msra.mxu0 %v1743
        %2091 = vmatpush.bf16.msra.mxu0 %v1741
        %2092 = vmatpush.bf16.msra.mxu0 %v1739
        %2093 = vmatpush.bf16.msra.mxu0 %v1737
        %2094 = vmatpush.bf16.msra.mxu0 %v1735
        %2095 = vmatmul.bf16.gmra.mxu0 %v1153
        %v2096 = vpop.f32.mrf.mxu0
        %v2097 = vadd.f32 %v2084, %v2096
        %v2098 = vpop.f32.mrf.mxu0
        %2099 = vdwg.mxu0
        %2100 = vmatpush.bf16.msra.mxu0 %v1765
        %2101 = vmatpush.bf16.msra.mxu0 %v1763
        %2102 = vmatpush.bf16.msra.mxu0 %v1761
        %2103 = vmatpush.bf16.msra.mxu0 %v1759
        %2104 = vmatpush.bf16.msra.mxu0 %v1757
        %2105 = vmatpush.bf16.msra.mxu0 %v1755
        %2106 = vmatpush.bf16.msra.mxu0 %v1753
        %2107 = vmatpush.bf16.msra.mxu0 %v1751
        %2108 = vmatmul.bf16.gmra.mxu0 %v1154
        %v2109 = vpop.f32.mrf.mxu0
        %v2110 = vadd.f32 %v2097, %v2109
        %v2111 = vpop.f32.mrf.mxu0
        %2112 = vdwg.mxu0
        %2113 = vmatpush.bf16.msra.mxu0 %v1781
        %2114 = vmatpush.bf16.msra.mxu0 %v1779
        %2115 = vmatpush.bf16.msra.mxu0 %v1777
        %2116 = vmatpush.bf16.msra.mxu0 %v1775
        %2117 = vmatpush.bf16.msra.mxu0 %v1773
        %2118 = vmatpush.bf16.msra.mxu0 %v1771
        %2119 = vmatpush.bf16.msra.mxu0 %v1769
        %2120 = vmatpush.bf16.msra.mxu0 %v1767
        %2121 = vmatmul.bf16.gmra.mxu0 %v1155
        %v2122 = vpop.f32.mrf.mxu0
        %v2123 = vadd.f32 %v2110, %v2122
        %v2124 = vpop.f32.mrf.mxu0
        %2125 = vdwg.mxu0
        %2126 = vmatpush.bf16.msra.mxu0 %v1797
        %2127 = vmatpush.bf16.msra.mxu0 %v1795
        %2128 = vmatpush.bf16.msra.mxu0 %v1793
        %2129 = vmatpush.bf16.msra.mxu0 %v1791
        %2130 = vmatpush.bf16.msra.mxu0 %v1789
        %2131 = vmatpush.bf16.msra.mxu0 %v1787
        %2132 = vmatpush.bf16.msra.mxu0 %v1785
        %2133 = vmatpush.bf16.msra.mxu0 %v1783
        %2134 = vmatmul.bf16.gmra.mxu0 %v1156
        %v2135 = vpop.f32.mrf.mxu0
        %v2136 = vadd.f32 %v2123, %v2135
        %v2137 = vpop.f32.mrf.mxu0
        %2138 = vdwg.mxu0
        %v2139 = vmax.f32 %v2032, 0.0
        %v2140 = vmax.f32 %v2136, 0.0
        %v2143 = vrot.slane %v2140, 7
        %v2144 = vsel %vm935, %v2139, %v2143
        %v2146 = vlaneseq
        %vm2147 = vcmp.ge.s32.totalorder %v2146, 0
        %vm2148 = vcmp.lt.s32.totalorder %v2146, 256
        %vm2149 = vmand %vm2147, %vm2148
        %2150 = vst.msk [vmem:[%s550] sm:$0x3] %vm2149, %v2144
        %s2151 = sand.u32 %s339, 1
        %s2152 = scalar_lea.sflag [#allocation4], %s2151
        %s2153 = sand.u32 %s339, 1
        %s2154 = smul.addr %s2153, 2
        %s2155 = scalar_lea.vmem [#allocation13], %s2154
        // Predicated region
        $region101: #{tpu_custom_call.1} parent=75 // pred_check
          %p2156 = pneg %p349
        $region102: #{tpu_custom_call.1} parent=75 // pred_check_branch
          %2158 = sbr.rel (%p2156) target = $region104
        $region103: #{tpu_custom_call.1} parent=75 // pred_region
          %2160 = vsyncadd %s2152, 0
          %s2161 = smul.addr %s32, 2
          %s2162 = scalar_lea.hbm %s14, %s2161
          %s2164 = sshll.u32 %s2155, 4
          %s2165 = int_to_ptr.vmem [resolvable:$true] %s2164
          %s2166 = sshll.u32 %s2162, 4
          %s2167 = int_to_ptr.hbm [resolvable:$true] %s2166
          %2169 = dma.vmem_to_hbm [thread:$0]  %s2165, 32, %s2167, %s2152
        $region104: #{tpu_custom_call.1} parent=75 // pred_fallthru
          _
      $region76: #{tpu_custom_call.1} parent=5 // pred_fallthru
        _
      %p2170 = scmp.le.s32.totalorder 2, %s27
      // Predicated region
      $region105: #{tpu_custom_call.1} parent=5 // pred_check
        %p2171 = pneg %p2170
      $region106: #{tpu_custom_call.1} parent=5 // pred_check_branch
        %2173 = sbr.rel (%p2171) target = $region108
      $region107: #{tpu_custom_call.1} parent=5 // pred_region
        %s2174 = ssub.s32 %s27, 2
        // Predicated region
        $region109: #{tpu_custom_call.1} parent=107 // pred_check
          %p2175 = pneg %p355
        $region110: #{tpu_custom_call.1} parent=107 // pred_check_branch
          %2177 = sbr.rel (%p2175) target = $region112
        $region111: #{tpu_custom_call.1} parent=107 // pred_region
          %s2178 = sand.u32 %s340, 1
          %s2179 = scalar_lea.sflag [#allocation4], %s2178
          %s2180 = sand.u32 %s340, 1
          %s2181 = smul.addr %s2180, 2
          %s2182 = scalar_lea.vmem [#allocation13], %s2181
          %2184 = dma.done %s2179, 32
        $region112: #{tpu_custom_call.1} parent=107 // pred_fallthru
          _
      $region108: #{tpu_custom_call.1} parent=5 // pred_fallthru
        _
    $region6: #{tpu_custom_call.1} parent=1 // loop_footer
      %s31 = sadd.s32 1, %s27
    $region7: #{tpu_custom_call.1} parent=1 // loop_footer_branch
      %26 = sbr.rel target = $region3
    $region8: #{tpu_custom_call.1} parent=1 // loop_exit
      _
    %2185 = vsyncpa [#allocation3], 1
    %s2186 = scalar_lea.sflag [#allocation3], 1
    %2187 = vsyncpa %s2186, 1
    %2188 = vsyncpa [#allocation6], 1
    %2189 = vsyncpa [#allocation9], 1
    %2190 = vsyncpa [#allocation12], 1
    %2191 = vsyncpa [#allocation4], 1
    %s2192 = scalar_lea.sflag [#allocation4], 1
    %2193 = vsyncpa %s2192, 1

</llo_original>
